<compile_context>
chip_gen: v5e
topology: v5e:2x2
jax: 0.10.0
libtpu: 0.0.40
codegen_flags: <defaults>
</compile_context>

<pallas_src>
import jax
import jax.numpy as jnp
from jax.experimental import pallas as pl
from jax.experimental.pallas import tpu as pltpu

_HIDDEN = 512
_TK_CAP = 2048   # max K (in_f) tile
_TM_CAP = 256    # max M (batch) tile


def _round_up(x, m):
    return ((x + m - 1) // m) * m


def _cdiv(a, b):
    return (a + b - 1) // b


# --------------------------------------------------------------------------
# Kernel body
# --------------------------------------------------------------------------
def _head_kernel(x_ref, w1_ref, b1_ref, w2_ref, b2_ref, o_ref, acc_ref):
    """Grid = (M tiles over batch, K tiles over in_f); K is the reduction."""
    k = pl.program_id(1)

    @pl.when(k == 0)
    def _():
        acc_ref[...] = jnp.zeros_like(acc_ref)

    # Linear(in_f, 512) with BN1 folded in: bf16 operands, f32 MXU accumulate.
    acc_ref[...] += jnp.dot(x_ref[...], w1_ref[...],
                            preferred_element_type=jnp.float32)

    @pl.when(k == pl.num_programs(1) - 1)
    def _():
        h = acc_ref[...] + b1_ref[...]          # bias (BN1 shift folded in)
        h = jnp.maximum(h, 0.0)                 # ReLU (Dropout = identity, eval)
        # Linear(512, 1) with BN2 folded; N=1 -> VPU multiply + lane reduction
        # instead of a single-column MXU matmul.
        out = jnp.sum(h * w2_ref[...], axis=-1, keepdims=True) + b2_ref[...]
        o_ref[...] = out


# --------------------------------------------------------------------------
# One-time parameter preparation (BN folding, cast, pad)
# --------------------------------------------------------------------------
def _fold_bn_into_linears(params, eps=1e-5):
    s1 = params["bn1_gamma"] * jax.lax.rsqrt(params["bn1_var"] + eps)
    t1 = params["bn1_beta"] - params["bn1_mean"] * s1
    s2 = params["bn2_gamma"] * jax.lax.rsqrt(params["bn2_var"] + eps)
    t2 = params["bn2_beta"] - params["bn2_mean"] * s2

    w1f = s1[:, None] * params["w1"]                # (in_f, 512)
    b1f = t1 @ params["w1"] + params["b1"]          # (512,)
    w2f = s2 * params["w2"][:, 0]                   # (512,)
    b2f = t2 @ params["w2"] + params["b2"]          # (1,)
    return w1f, b1f, w2f, b2f


def make_fcn_forward(params, in_f):
    """Returns a jitted forward(x_nchw) -> (B, 1) float32 for FCN/Head."""
    # ---- K tiling chosen once from in_f (minimal padding). ----
    in_f_128 = _round_up(in_f, 128)
    k_tiles = _cdiv(in_f_128, _TK_CAP)
    tk = _round_up(_cdiv(in_f_128, k_tiles), 128)
    in_f_pad = tk * k_tiles

    # ---- One-time weight transform (NOT in the per-call hot path). ----
    w1f, b1f, w2f, b2f = _fold_bn_into_linears(params)
    w1_p = jnp.pad(w1f.astype(jnp.bfloat16), ((0, in_f_pad - in_f), (0, 0)))
    b1_r = b1f.reshape(1, _HIDDEN).astype(jnp.float32)
    w2_r = w2f.reshape(1, _HIDDEN).astype(jnp.float32)
    b2_r = b2f.reshape(1, 1).astype(jnp.float32)

    def forward(x_nchw):
        # TODO(synk): `base` is an injected, unspecified module in the
        # reference; treated as identity so the Head is the kernelized path.
        B = x_nchw.shape[0]
        x_flat = x_nchw.reshape(B, -1)              # nn.Flatten (row-major)

        # ---- M tiling (per call; minimal batch padding). ----
        b_pad8 = _round_up(B, 8)
        m_tiles = _cdiv(b_pad8, _TM_CAP)
        tm = _round_up(_cdiv(b_pad8, m_tiles), 8)
        B_pad = tm * m_tiles

        x_p = jnp.pad(x_flat.astype(jnp.bfloat16),
                      ((0, B_pad - B), (0, in_f_pad - in_f)))

        # ---- VMEM budget: double-buffered bf16 tiles + f32 accumulator. ----
        vmem_bytes = (2 * 2 * (tm * tk + tk * _HIDDEN)   # pipelined bf16 tiles
                      + tm * _HIDDEN * 4                 # f32 accumulator
                      + 3 * _HIDDEN * 4 + 2 * tm * 4)    # small operands + out
        vmem_limit = int(min(max(vmem_bytes + (8 << 20), 32 << 20), 48 << 20))

        cost = pl.CostEstimate(
            flops=2 * B_pad * in_f_pad * _HIDDEN + 4 * B_pad * _HIDDEN,
            transcendentals=0,
            bytes_accessed=(B_pad * in_f_pad * 2 + in_f_pad * _HIDDEN * 2
                            + 3 * _HIDDEN * 4 + B_pad * 4),
        )

        out_pad = pl.pallas_call(
            _head_kernel,
            out_shape=jax.ShapeDtypeStruct((B_pad, 1), jnp.float32),
            grid_spec=pltpu.PrefetchScalarGridSpec(
                num_scalar_prefetch=0,
                grid=(m_tiles, k_tiles),
                in_specs=[
                    pl.BlockSpec((tm, tk), lambda i, k: (i, k)),        # x
                    pl.BlockSpec((tk, _HIDDEN), lambda i, k: (k, 0)),   # w1'
                    pl.BlockSpec((1, _HIDDEN), lambda i, k: (0, 0)),    # b1'
                    pl.BlockSpec((1, _HIDDEN), lambda i, k: (0, 0)),    # w2'
                    pl.BlockSpec((1, 1), lambda i, k: (0, 0)),          # b2'
                ],
                out_specs=pl.BlockSpec((tm, 1), lambda i, k: (i, 0)),
                scratch_shapes=[pltpu.VMEM((tm, _HIDDEN), jnp.float32)],
            ),
            compiler_params=pltpu.CompilerParams(
                dimension_semantics=("parallel", "arbitrary"),
                vmem_limit_bytes=vmem_limit),
            cost_estimate=cost,
        )(x_p, w1_p, b1_r, w2_r, b2_r)

        return out_pad[:B]

    return jax.jit(forward)


# --------------------------------------------------------------------------
# Parameter init (matches PyTorch defaults in structure)
# --------------------------------------------------------------------------
def init_params(key, in_f):
    ks = jax.random.split(key, 8)
    lim1 = 1.0 / jnp.sqrt(in_f)
    lim2 = 1.0 / jnp.sqrt(512.0)
    return {
        "w1": jax.random.uniform(ks[0], (in_f, 512), jnp.float32, -lim1, lim1),
        "b1": jax.random.uniform(ks[1], (512,), jnp.float32, -lim1, lim1),
        "w2": jax.random.uniform(ks[2], (512, 1), jnp.float32, -lim2, lim2),
        "b2": jax.random.uniform(ks[3], (1,), jnp.float32, -lim2, lim2),
        # BatchNorm1d(in_f) running stats + affine
        "bn1_gamma": jnp.ones((in_f,), jnp.float32),
        "bn1_beta": jnp.zeros((in_f,), jnp.float32),
        "bn1_mean": 0.1 * jax.random.normal(ks[4], (in_f,), jnp.float32),
        "bn1_var": 1.0 + 0.1 * jax.random.uniform(ks[5], (in_f,), jnp.float32),
        # BatchNorm1d(512)
        "bn2_gamma": jnp.ones((512,), jnp.float32),
        "bn2_beta": jnp.zeros((512,), jnp.float32),
        "bn2_mean": 0.1 * jax.random.normal(ks[6], (512,), jnp.float32),
        "bn2_var": 1.0 + 0.1 * jax.random.uniform(ks[7], (512,), jnp.float32),
    }


if __name__ == "__main__":
    key = jax.random.PRNGKey(0)
    k_x, k_p = jax.random.split(key)

    # Small NCHW input: (batch=2, channels=4, H=16, W=16) -> in_f = 1024
    B, C, H, W = 2, 4, 16, 16
    in_f = C * H * W
    x = jax.random.normal(k_x, (B, C, H, W), jnp.float32)

    params = init_params(k_p, in_f)
    fwd = make_fcn_forward(params, in_f)   # one-time BN fold / cast / pad

    out = jax.block_until_ready(fwd(x))
    assert out.shape == (B, 1) and out.dtype == jnp.float32
    print("KERNEL_OK")
</pallas_src>

<mosaic_0001>
module attributes {stable_mosaic.version = 11 : i64} {
  func.func @_head_kernel(%arg0: i32, %arg1: i32, %arg2: memref<8x1024xbf16, #tpu.memory_space<vmem>>, %arg3: memref<1024x512xbf16, #tpu.memory_space<vmem>>, %arg4: memref<1x512xf32, #tpu.memory_space<vmem>>, %arg5: memref<1x512xf32, #tpu.memory_space<vmem>>, %arg6: memref<1x1xf32, #tpu.memory_space<vmem>>, %arg7: memref<8x1xf32, #tpu.memory_space<vmem>>, %arg8: memref<8x512xf32, #tpu.memory_space<vmem>>) attributes {dimension_semantics = [#tpu.dimension_semantics<parallel>, #tpu.dimension_semantics<arbitrary>], iteration_bounds = array<i64: 1, 1>, scalar_prefetch = 0 : i64, scratch_operands = 1 : i64, tpu.core_type = #tpu.core_type<tc>, window_params = [{transform_indices = @transform_0, window_bounds = array<i64: 8, 1024>}, {transform_indices = @transform_1, window_bounds = array<i64: 1024, 512>}, {pipeline_mode = #tpu.pipeline_mode<synchronous>, transform_indices = @transform_2, window_bounds = array<i64: 1, 512>}, {pipeline_mode = #tpu.pipeline_mode<synchronous>, transform_indices = @transform_3, window_bounds = array<i64: 1, 512>}, {pipeline_mode = #tpu.pipeline_mode<synchronous>, transform_indices = @transform_4, window_bounds = array<i64: 1, 1>}, {transform_indices = @transform_5, window_bounds = array<i64: 8, 1>}]} {
    %c0_i32 = arith.constant 0 : i32
    %0 = arith.cmpi eq, %arg1, %c0_i32 : i32
    %1 = arith.extui %0 : i1 to i32
    %c0_i32_0 = arith.constant 0 : i32
    %2 = arith.cmpi ne, %1, %c0_i32_0 : i32
    scf.if %2 {
      %cst_10 = arith.constant 0.000000e+00 : f32
      %12 = vector.broadcast %cst_10 : f32 to vector<8x512xf32>
      %c0_11 = arith.constant 0 : index
      %c0_12 = arith.constant 0 : index
      %13 = vector.load %arg8[%c0_11, %c0_12] : memref<8x512xf32, #tpu.memory_space<vmem>>, vector<8x512xf32>
      tpu.vector_store %arg8[%c0_11, %c0_12], %12 {strides = array<i32>} : memref<8x512xf32, #tpu.memory_space<vmem>>, vector<8x512xf32>,
    } else {
    }
    %c0 = arith.constant 0 : index
    %c0_1 = arith.constant 0 : index
    %3 = vector.load %arg8[%c0, %c0_1] : memref<8x512xf32, #tpu.memory_space<vmem>>, vector<8x512xf32>
    %c0_2 = arith.constant 0 : index
    %c0_3 = arith.constant 0 : index
    %4 = vector.load %arg2[%c0_2, %c0_3] : memref<8x1024xbf16, #tpu.memory_space<vmem>>, vector<8x1024xbf16>
    %c0_4 = arith.constant 0 : index
    %c0_5 = arith.constant 0 : index
    %5 = vector.load %arg3[%c0_4, %c0_5] : memref<1024x512xbf16, #tpu.memory_space<vmem>>, vector<1024x512xbf16>
    %cst = arith.constant dense<0.000000e+00> : vector<8x512xf32>
    %6 = tpu.matmul %4, %5, %cst {dimension_numbers = #tpu.dot_dimension_numbers<[1], [0], [0], [1], [0, 0, 1, 1], [], []>} : vector<8x1024xbf16>, vector<1024x512xbf16>, vector<8x512xf32> -> vector<8x512xf32>
    %7 = arith.addf %3, %6 : vector<8x512xf32>
    %c0_6 = arith.constant 0 : index
    %c0_7 = arith.constant 0 : index
    %8 = vector.load %arg8[%c0_6, %c0_7] : memref<8x512xf32, #tpu.memory_space<vmem>>, vector<8x512xf32>
    tpu.vector_store %arg8[%c0_6, %c0_7], %7 {strides = array<i32>} : memref<8x512xf32, #tpu.memory_space<vmem>>, vector<8x512xf32>,
    %c0_i32_8 = arith.constant 0 : i32
    %9 = arith.cmpi eq, %arg1, %c0_i32_8 : i32
    %10 = arith.extui %9 : i1 to i32
    %c0_i32_9 = arith.constant 0 : i32
    %11 = arith.cmpi ne, %10, %c0_i32_9 : i32
    scf.if %11 {
      %c0_10 = arith.constant 0 : index
      %c0_11 = arith.constant 0 : index
      %12 = vector.load %arg8[%c0_10, %c0_11] : memref<8x512xf32, #tpu.memory_space<vmem>>, vector<8x512xf32>
      %c0_12 = arith.constant 0 : index
      %c0_13 = arith.constant 0 : index
      %13 = vector.load %arg4[%c0_12, %c0_13] : memref<1x512xf32, #tpu.memory_space<vmem>>, vector<1x512xf32>
      %14 = vector.broadcast %13 : vector<1x512xf32> to vector<8x512xf32>
      %15 = arith.addf %12, %14 : vector<8x512xf32>
      %cst_14 = arith.constant 0.000000e+00 : f32
      %16 = vector.broadcast %cst_14 : f32 to vector<8x512xf32>
      %17 = arith.maximumf %15, %16 : vector<8x512xf32>
      %c0_15 = arith.constant 0 : index
      %c0_16 = arith.constant 0 : index
      %18 = vector.load %arg5[%c0_15, %c0_16] : memref<1x512xf32, #tpu.memory_space<vmem>>, vector<1x512xf32>
      %19 = vector.broadcast %18 : vector<1x512xf32> to vector<8x512xf32>
      %20 = arith.mulf %17, %19 : vector<8x512xf32>
      %cst_17 = arith.constant dense<0.000000e+00> : vector<8xf32>
      %21 = vector.multi_reduction <add>, %20, %cst_17 [1] : vector<8x512xf32> to vector<8xf32>
      %22 = vector.shape_cast %21 : vector<8xf32> to vector<8x1xf32>
      %c0_18 = arith.constant 0 : index
      %c0_19 = arith.constant 0 : index
      %23 = vector.load %arg6[%c0_18, %c0_19] : memref<1x1xf32, #tpu.memory_space<vmem>>, vector<1x1xf32>
      %24 = vector.broadcast %23 : vector<1x1xf32> to vector<8x1xf32>
      %25 = arith.addf %22, %24 : vector<8x1xf32>
      %c0_20 = arith.constant 0 : index
      %c0_21 = arith.constant 0 : index
      %26 = vector.load %arg7[%c0_20, %c0_21] : memref<8x1xf32, #tpu.memory_space<vmem>>, vector<8x1xf32>
      tpu.vector_store %arg7[%c0_20, %c0_21], %25 {strides = array<i32>} : memref<8x1xf32, #tpu.memory_space<vmem>>, vector<8x1xf32>,
    } else {
    }
    return
  }
  func.func @transform_0(%arg0: i32, %arg1: i32) -> (i32, i32) {
    %c0_i32 = arith.constant 0 : i32
    return %arg0, %arg1 : i32, i32
  }
  func.func @transform_1(%arg0: i32, %arg1: i32) -> (i32, i32) {
    %c0_i32 = arith.constant 0 : i32
    %c0_i32_0 = arith.constant 0 : i32
    return %arg1, %c0_i32 : i32, i32
  }
  func.func @transform_2(%arg0: i32, %arg1: i32) -> (i32, i32) {
    %c0_i32 = arith.constant 0 : i32
    %c0_i32_0 = arith.constant 0 : i32
    %c0_i32_1 = arith.constant 0 : i32
    return %c0_i32, %c0_i32_0 : i32, i32
  }
  func.func @transform_3(%arg0: i32, %arg1: i32) -> (i32, i32) {
    %c0_i32 = arith.constant 0 : i32
    %c0_i32_0 = arith.constant 0 : i32
    %c0_i32_1 = arith.constant 0 : i32
    return %c0_i32, %c0_i32_0 : i32, i32
  }
  func.func @transform_4(%arg0: i32, %arg1: i32) -> (i32, i32) {
    %c0_i32 = arith.constant 0 : i32
    %c0_i32_0 = arith.constant 0 : i32
    %c0_i32_1 = arith.constant 0 : i32
    return %c0_i32, %c0_i32_0 : i32, i32
  }
  func.func @transform_5(%arg0: i32, %arg1: i32) -> (i32, i32) {
    %c0_i32 = arith.constant 0 : i32
    %c0_i32_0 = arith.constant 0 : i32
    return %arg0, %c0_i32 : i32, i32
  }
}

</mosaic_0001>

<llo_original>
// kernel: forward.1
$region0: #{forward.1}
  #allocation0 [shape = 'u32[]', space=smem, size = 0x4, offset = 0x4, fixed_abs, tag = 'smem constant byte address 0x4 - core index']
  #allocation1 [shape = 'u32[72,128]{1,0:T(1,128)}', space=vmem, size = 0x9000, scoped, tag = 'internal scratch']
  #allocation2 [shape = 'f32[8,512]{1,0:T(8,128)}', space=vmem, size = 0x4000, scoped, tag = 'scratch operand']
  #allocation3 [shape = 'f32[1,1]{1,0:T(1,128)S(1)}', space=vmem, size = 0x200, scoped, tag = 'scoped memory for forward.1']
  %s0 = inlined_call_operand.vmem [shape: bf16[8,1024], index: 0, kind: input, shape index: {}]
  %s1 = inlined_call_operand.hbm [shape: bf16[1024,512], index: 1, kind: input, shape index: {}]
  %s2 = inlined_call_operand.vmem [shape: f32[1,512], index: 2, kind: input, shape index: {}]
  %s3 = inlined_call_operand.vmem [shape: f32[1,512], index: 3, kind: input, shape index: {}]
  %s4 = inlined_call_operand.<no memory space> [shape: f32[1,1], index: 4, kind: input, shape index: {}]
  %s5 = inlined_call_operand.vmem [shape: f32[8,1], index: 5, kind: output, shape index: {}]
  %s6 = sld [smem:[#allocation0]]
  $region42: #{forward.1} parent=0
    _
  %s8 = ssub.s32 1, %s6
  %s9 = scalar_select 0, %s8, %s6
  %v10 = vstv %s4
  %11 = vst [vmem:[#allocation3] sm:$0x1] %v10
  $region1: #{forward.1} parent=0
    #allocation4 [shape = 'u8[1048576]{0}', space=vmem, size = 0x100000, scoped, tag = 'input window, operand 1, single buffered']
    #allocation5 [shape = 's32[1]{0}', space=sflag, size = 0x4, scoped, tag = 'scoped memory for forward.1']
    %12 = vsyncpa [#allocation5], 0
    // Predicated region
    $region2: #{forward.1} parent=1 // pred_check
      _
    $region3: #{forward.1} parent=1 // pred_check_branch
      %14 = sbr.rel (0) target = $region5
    $region4: #{forward.1} parent=1 // pred_region
      _
    $region5: #{forward.1} parent=1 // pred_fallthru
      _
    // Predicated region
    $region6: #{forward.1} parent=1 // pred_check
      _
    $region7: #{forward.1} parent=1 // pred_check_branch
      %16 = sbr.rel (0) target = $region9
    $region8: #{forward.1} parent=1 // pred_region
      %18 = vsyncadd [#allocation5], 0
      %s19 = sshll.u32 %s1, 4
      %s20 = int_to_ptr.hbm [resolvable:$true] %s19
      %s21 = sshll.u32 [#allocation4], 4
      %s22 = int_to_ptr.vmem [resolvable:$true] %s21
      %27 = dma.hbm_to_vmem [thread:$0]  %s20, 32768, %s22, [#allocation5], 256, 256, 16
    $region9: #{forward.1} parent=1 // pred_fallthru
      _
    // Predicated region
    $region10: #{forward.1} parent=1 // pred_check
      _
    $region11: #{forward.1} parent=1 // pred_check_branch
      %29 = sbr.rel (0) target = $region13
    $region12: #{forward.1} parent=1 // pred_region
      _
    $region13: #{forward.1} parent=1 // pred_fallthru
      _
    // Predicated region
    $region14: #{forward.1} parent=1 // pred_check
      _
    $region15: #{forward.1} parent=1 // pred_check_branch
      %31 = sbr.rel (0) target = $region17
    $region16: #{forward.1} parent=1 // pred_region
      _
    $region17: #{forward.1} parent=1 // pred_fallthru
      _
    // Predicated region
    $region18: #{forward.1} parent=1 // pred_check
      _
    $region19: #{forward.1} parent=1 // pred_check_branch
      %33 = sbr.rel (0) target = $region21
    $region20: #{forward.1} parent=1 // pred_region
      _
    $region21: #{forward.1} parent=1 // pred_fallthru
      _
    // Predicated region
    $region22: #{forward.1} parent=1 // pred_check
      _
    $region23: #{forward.1} parent=1 // pred_check_branch
      %35 = sbr.rel (0) target = $region25
    $region24: #{forward.1} parent=1 // pred_region
      %37 = dma.done [#allocation5], 32768
    $region25: #{forward.1} parent=1 // pred_fallthru
      _
    %p38 = scmp.eq.s32.totalorder 0, 0
    // Predicated region
    $region26: #{forward.1} parent=1 // pred_check
      %p39 = pneg %p38
    $region27: #{forward.1} parent=1 // pred_check_branch
      %41 = sbr.rel (%p39) target = $region29
    $region28: #{forward.1} parent=1 // pred_region
      %42 = vst [vmem:[#allocation2] sm:$0xff] 0.0
      %43 = vst [vmem:[#allocation2 + $0x8] sm:$0xff] 0.0
      %44 = vst [vmem:[#allocation2 + $0x10] sm:$0xff] 0.0
      %45 = vst [vmem:[#allocation2 + $0x18] sm:$0xff] 0.0
    $region29: #{forward.1} parent=1 // pred_fallthru
      _
    %v46 = vld [vmem:[#allocation2] sm:$0xff]
    %v47 = vld [vmem:[#allocation2 + $0x8] sm:$0xff]
    %v48 = vld [vmem:[#allocation2 + $0x10] sm:$0xff]
    %v49 = vld [vmem:[#allocation2 + $0x18] sm:$0xff]
    %v50 = vld [vmem:[%s0] sm:$0xff]
    %v51 = vld [vmem:[%s0 + $0x8] sm:$0xff]
    %v52 = vld [vmem:[%s0 + $0x10] sm:$0xff]
    %v53 = vld [vmem:[%s0 + $0x18] sm:$0xff]
    %v54 = vld [vmem:[#allocation4] sm:$0xff]
    %v55 = vld [vmem:[#allocation4 + $0x8] sm:$0xff]
    %v56 = vld [vmem:[#allocation4 + $0x10] sm:$0xff]
    %v57 = vld [vmem:[#allocation4 + $0x18] sm:$0xff]
    %v58 = vld [vmem:[#allocation4 + $0x20] sm:$0xff]
    %v59 = vld [vmem:[#allocation4 + $0x28] sm:$0xff]
    %v60 = vld [vmem:[#allocation4 + $0x30] sm:$0xff]
    %v61 = vld [vmem:[#allocation4 + $0x38] sm:$0xff]
    %v62 = vld [vmem:[#allocation4 + $0x40] sm:$0xff]
    %v63 = vld [vmem:[#allocation4 + $0x48] sm:$0xff]
    %v64 = vld [vmem:[#allocation4 + $0x50] sm:$0xff]
    %v65 = vld [vmem:[#allocation4 + $0x58] sm:$0xff]
    %v66 = vld [vmem:[#allocation4 + $0x60] sm:$0xff]
    %v67 = vld [vmem:[#allocation4 + $0x68] sm:$0xff]
    %v68 = vld [vmem:[#allocation4 + $0x70] sm:$0xff]
    %v69 = vld [vmem:[#allocation4 + $0x78] sm:$0xff]
    %v70 = vld [vmem:[#allocation4 + $0x80] sm:$0xff]
    %v71 = vld [vmem:[#allocation4 + $0x88] sm:$0xff]
    %v72 = vld [vmem:[#allocation4 + $0x90] sm:$0xff]
    %v73 = vld [vmem:[#allocation4 + $0x98] sm:$0xff]
    %v74 = vld [vmem:[#allocation4 + $0xa0] sm:$0xff]
    %v75 = vld [vmem:[#allocation4 + $0xa8] sm:$0xff]
    %v76 = vld [vmem:[#allocation4 + $0xb0] sm:$0xff]
    %v77 = vld [vmem:[#allocation4 + $0xb8] sm:$0xff]
    %v78 = vld [vmem:[#allocation4 + $0xc0] sm:$0xff]
    %v79 = vld [vmem:[#allocation4 + $0xc8] sm:$0xff]
    %v80 = vld [vmem:[#allocation4 + $0xd0] sm:$0xff]
    %v81 = vld [vmem:[#allocation4 + $0xd8] sm:$0xff]
    %v82 = vld [vmem:[#allocation4 + $0xe0] sm:$0xff]
    %v83 = vld [vmem:[#allocation4 + $0xe8] sm:$0xff]
    %v84 = vld [vmem:[#allocation4 + $0xf0] sm:$0xff]
    %v85 = vld [vmem:[#allocation4 + $0xf8] sm:$0xff]
    %v86 = vld [vmem:[#allocation4 + $0x100] sm:$0xff]
    %v87 = vld [vmem:[#allocation4 + $0x108] sm:$0xff]
    %v88 = vld [vmem:[#allocation4 + $0x110] sm:$0xff]
    %v89 = vld [vmem:[#allocation4 + $0x118] sm:$0xff]
    %v90 = vld [vmem:[#allocation4 + $0x120] sm:$0xff]
    %v91 = vld [vmem:[#allocation4 + $0x128] sm:$0xff]
    %v92 = vld [vmem:[#allocation4 + $0x130] sm:$0xff]
    %v93 = vld [vmem:[#allocation4 + $0x138] sm:$0xff]
    %v94 = vld [vmem:[#allocation4 + $0x140] sm:$0xff]
    %v95 = vld [vmem:[#allocation4 + $0x148] sm:$0xff]
    %v96 = vld [vmem:[#allocation4 + $0x150] sm:$0xff]
    %v97 = vld [vmem:[#allocation4 + $0x158] sm:$0xff]
    %v98 = vld [vmem:[#allocation4 + $0x160] sm:$0xff]
    %v99 = vld [vmem:[#allocation4 + $0x168] sm:$0xff]
    %v100 = vld [vmem:[#allocation4 + $0x170] sm:$0xff]
    %v101 = vld [vmem:[#allocation4 + $0x178] sm:$0xff]
    %v102 = vld [vmem:[#allocation4 + $0x180] sm:$0xff]
    %v103 = vld [vmem:[#allocation4 + $0x188] sm:$0xff]
    %v104 = vld [vmem:[#allocation4 + $0x190] sm:$0xff]
    %v105 = vld [vmem:[#allocation4 + $0x198] sm:$0xff]
    %v106 = vld [vmem:[#allocation4 + $0x1a0] sm:$0xff]
    %v107 = vld [vmem:[#allocation4 + $0x1a8] sm:$0xff]
    %v108 = vld [vmem:[#allocation4 + $0x1b0] sm:$0xff]
    %v109 = vld [vmem:[#allocation4 + $0x1b8] sm:$0xff]
    %v110 = vld [vmem:[#allocation4 + $0x1c0] sm:$0xff]
    %v111 = vld [vmem:[#allocation4 + $0x1c8] sm:$0xff]
    %v112 = vld [vmem:[#allocation4 + $0x1d0] sm:$0xff]
    %v113 = vld [vmem:[#allocation4 + $0x1d8] sm:$0xff]
    %v114 = vld [vmem:[#allocation4 + $0x1e0] sm:$0xff]
    %v115 = vld [vmem:[#allocation4 + $0x1e8] sm:$0xff]
    %v116 = vld [vmem:[#allocation4 + $0x1f0] sm:$0xff]
    %v117 = vld [vmem:[#allocation4 + $0x1f8] sm:$0xff]
    %v118 = vld [vmem:[#allocation4 + $0x200] sm:$0xff]
    %v119 = vld [vmem:[#allocation4 + $0x208] sm:$0xff]
    %v120 = vld [vmem:[#allocation4 + $0x210] sm:$0xff]
    %v121 = vld [vmem:[#allocation4 + $0x218] sm:$0xff]
    %v122 = vld [vmem:[#allocation4 + $0x220] sm:$0xff]
    %v123 = vld [vmem:[#allocation4 + $0x228] sm:$0xff]
    %v124 = vld [vmem:[#allocation4 + $0x230] sm:$0xff]
    %v125 = vld [vmem:[#allocation4 + $0x238] sm:$0xff]
    %v126 = vld [vmem:[#allocation4 + $0x240] sm:$0xff]
    %v127 = vld [vmem:[#allocation4 + $0x248] sm:$0xff]
    %v128 = vld [vmem:[#allocation4 + $0x250] sm:$0xff]
    %v129 = vld [vmem:[#allocation4 + $0x258] sm:$0xff]
    %v130 = vld [vmem:[#allocation4 + $0x260] sm:$0xff]
    %v131 = vld [vmem:[#allocation4 + $0x268] sm:$0xff]
    %v132 = vld [vmem:[#allocation4 + $0x270] sm:$0xff]
    %v133 = vld [vmem:[#allocation4 + $0x278] sm:$0xff]
    %v134 = vld [vmem:[#allocation4 + $0x280] sm:$0xff]
    %v135 = vld [vmem:[#allocation4 + $0x288] sm:$0xff]
    %v136 = vld [vmem:[#allocation4 + $0x290] sm:$0xff]
    %v137 = vld [vmem:[#allocation4 + $0x298] sm:$0xff]
    %v138 = vld [vmem:[#allocation4 + $0x2a0] sm:$0xff]
    %v139 = vld [vmem:[#allocation4 + $0x2a8] sm:$0xff]
    %v140 = vld [vmem:[#allocation4 + $0x2b0] sm:$0xff]
    %v141 = vld [vmem:[#allocation4 + $0x2b8] sm:$0xff]
    %v142 = vld [vmem:[#allocation4 + $0x2c0] sm:$0xff]
    %v143 = vld [vmem:[#allocation4 + $0x2c8] sm:$0xff]
    %v144 = vld [vmem:[#allocation4 + $0x2d0] sm:$0xff]
    %v145 = vld [vmem:[#allocation4 + $0x2d8] sm:$0xff]
    %v146 = vld [vmem:[#allocation4 + $0x2e0] sm:$0xff]
    %v147 = vld [vmem:[#allocation4 + $0x2e8] sm:$0xff]
    %v148 = vld [vmem:[#allocation4 + $0x2f0] sm:$0xff]
    %v149 = vld [vmem:[#allocation4 + $0x2f8] sm:$0xff]
    %v150 = vld [vmem:[#allocation4 + $0x300] sm:$0xff]
    %v151 = vld [vmem:[#allocation4 + $0x308] sm:$0xff]
    %v152 = vld [vmem:[#allocation4 + $0x310] sm:$0xff]
    %v153 = vld [vmem:[#allocation4 + $0x318] sm:$0xff]
    %v154 = vld [vmem:[#allocation4 + $0x320] sm:$0xff]
    %v155 = vld [vmem:[#allocation4 + $0x328] sm:$0xff]
    %v156 = vld [vmem:[#allocation4 + $0x330] sm:$0xff]
    %v157 = vld [vmem:[#allocation4 + $0x338] sm:$0xff]
    %v158 = vld [vmem:[#allocation4 + $0x340] sm:$0xff]
    %v159 = vld [vmem:[#allocation4 + $0x348] sm:$0xff]
    %v160 = vld [vmem:[#allocation4 + $0x350] sm:$0xff]
    %v161 = vld [vmem:[#allocation4 + $0x358] sm:$0xff]
    %v162 = vld [vmem:[#allocation4 + $0x360] sm:$0xff]
    %v163 = vld [vmem:[#allocation4 + $0x368] sm:$0xff]
    %v164 = vld [vmem:[#allocation4 + $0x370] sm:$0xff]
    %v165 = vld [vmem:[#allocation4 + $0x378] sm:$0xff]
    %v166 = vld [vmem:[#allocation4 + $0x380] sm:$0xff]
    %v167 = vld [vmem:[#allocation4 + $0x388] sm:$0xff]
    %v168 = vld [vmem:[#allocation4 + $0x390] sm:$0xff]
    %v169 = vld [vmem:[#allocation4 + $0x398] sm:$0xff]
    %v170 = vld [vmem:[#allocation4 + $0x3a0] sm:$0xff]
    %v171 = vld [vmem:[#allocation4 + $0x3a8] sm:$0xff]
    %v172 = vld [vmem:[#allocation4 + $0x3b0] sm:$0xff]
    %v173 = vld [vmem:[#allocation4 + $0x3b8] sm:$0xff]
    %v174 = vld [vmem:[#allocation4 + $0x3c0] sm:$0xff]
    %v175 = vld [vmem:[#allocation4 + $0x3c8] sm:$0xff]
    %v176 = vld [vmem:[#allocation4 + $0x3d0] sm:$0xff]
    %v177 = vld [vmem:[#allocation4 + $0x3d8] sm:$0xff]
    %v178 = vld [vmem:[#allocation4 + $0x3e0] sm:$0xff]
    %v179 = vld [vmem:[#allocation4 + $0x3e8] sm:$0xff]
    %v180 = vld [vmem:[#allocation4 + $0x3f0] sm:$0xff]
    %v181 = vld [vmem:[#allocation4 + $0x3f8] sm:$0xff]
    %v182 = vld [vmem:[#allocation4 + $0x400] sm:$0xff]
    %v183 = vld [vmem:[#allocation4 + $0x408] sm:$0xff]
    %v184 = vld [vmem:[#allocation4 + $0x410] sm:$0xff]
    %v185 = vld [vmem:[#allocation4 + $0x418] sm:$0xff]
    %v186 = vld [vmem:[#allocation4 + $0x420] sm:$0xff]
    %v187 = vld [vmem:[#allocation4 + $0x428] sm:$0xff]
    %v188 = vld [vmem:[#allocation4 + $0x430] sm:$0xff]
    %v189 = vld [vmem:[#allocation4 + $0x438] sm:$0xff]
    %v190 = vld [vmem:[#allocation4 + $0x440] sm:$0xff]
    %v191 = vld [vmem:[#allocation4 + $0x448] sm:$0xff]
    %v192 = vld [vmem:[#allocation4 + $0x450] sm:$0xff]
    %v193 = vld [vmem:[#allocation4 + $0x458] sm:$0xff]
    %v194 = vld [vmem:[#allocation4 + $0x460] sm:$0xff]
    %v195 = vld [vmem:[#allocation4 + $0x468] sm:$0xff]
    %v196 = vld [vmem:[#allocation4 + $0x470] sm:$0xff]
    %v197 = vld [vmem:[#allocation4 + $0x478] sm:$0xff]
    %v198 = vld [vmem:[#allocation4 + $0x480] sm:$0xff]
    %v199 = vld [vmem:[#allocation4 + $0x488] sm:$0xff]
    %v200 = vld [vmem:[#allocation4 + $0x490] sm:$0xff]
    %v201 = vld [vmem:[#allocation4 + $0x498] sm:$0xff]
    %v202 = vld [vmem:[#allocation4 + $0x4a0] sm:$0xff]
    %v203 = vld [vmem:[#allocation4 + $0x4a8] sm:$0xff]
    %v204 = vld [vmem:[#allocation4 + $0x4b0] sm:$0xff]
    %v205 = vld [vmem:[#allocation4 + $0x4b8] sm:$0xff]
    %v206 = vld [vmem:[#allocation4 + $0x4c0] sm:$0xff]
    %v207 = vld [vmem:[#allocation4 + $0x4c8] sm:$0xff]
    %v208 = vld [vmem:[#allocation4 + $0x4d0] sm:$0xff]
    %v209 = vld [vmem:[#allocation4 + $0x4d8] sm:$0xff]
    %v210 = vld [vmem:[#allocation4 + $0x4e0] sm:$0xff]
    %v211 = vld [vmem:[#allocation4 + $0x4e8] sm:$0xff]
    %v212 = vld [vmem:[#allocation4 + $0x4f0] sm:$0xff]
    %v213 = vld [vmem:[#allocation4 + $0x4f8] sm:$0xff]
    %v214 = vld [vmem:[#allocation4 + $0x500] sm:$0xff]
    %v215 = vld [vmem:[#allocation4 + $0x508] sm:$0xff]
    %v216 = vld [vmem:[#allocation4 + $0x510] sm:$0xff]
    %v217 = vld [vmem:[#allocation4 + $0x518] sm:$0xff]
    %v218 = vld [vmem:[#allocation4 + $0x520] sm:$0xff]
    %v219 = vld [vmem:[#allocation4 + $0x528] sm:$0xff]
    %v220 = vld [vmem:[#allocation4 + $0x530] sm:$0xff]
    %v221 = vld [vmem:[#allocation4 + $0x538] sm:$0xff]
    %v222 = vld [vmem:[#allocation4 + $0x540] sm:$0xff]
    %v223 = vld [vmem:[#allocation4 + $0x548] sm:$0xff]
    %v224 = vld [vmem:[#allocation4 + $0x550] sm:$0xff]
    %v225 = vld [vmem:[#allocation4 + $0x558] sm:$0xff]
    %v226 = vld [vmem:[#allocation4 + $0x560] sm:$0xff]
    %v227 = vld [vmem:[#allocation4 + $0x568] sm:$0xff]
    %v228 = vld [vmem:[#allocation4 + $0x570] sm:$0xff]
    %v229 = vld [vmem:[#allocation4 + $0x578] sm:$0xff]
    %v230 = vld [vmem:[#allocation4 + $0x580] sm:$0xff]
    %v231 = vld [vmem:[#allocation4 + $0x588] sm:$0xff]
    %v232 = vld [vmem:[#allocation4 + $0x590] sm:$0xff]
    %v233 = vld [vmem:[#allocation4 + $0x598] sm:$0xff]
    %v234 = vld [vmem:[#allocation4 + $0x5a0] sm:$0xff]
    %v235 = vld [vmem:[#allocation4 + $0x5a8] sm:$0xff]
    %v236 = vld [vmem:[#allocation4 + $0x5b0] sm:$0xff]
    %v237 = vld [vmem:[#allocation4 + $0x5b8] sm:$0xff]
    %v238 = vld [vmem:[#allocation4 + $0x5c0] sm:$0xff]
    %v239 = vld [vmem:[#allocation4 + $0x5c8] sm:$0xff]
    %v240 = vld [vmem:[#allocation4 + $0x5d0] sm:$0xff]
    %v241 = vld [vmem:[#allocation4 + $0x5d8] sm:$0xff]
    %v242 = vld [vmem:[#allocation4 + $0x5e0] sm:$0xff]
    %v243 = vld [vmem:[#allocation4 + $0x5e8] sm:$0xff]
    %v244 = vld [vmem:[#allocation4 + $0x5f0] sm:$0xff]
    %v245 = vld [vmem:[#allocation4 + $0x5f8] sm:$0xff]
    %v246 = vld [vmem:[#allocation4 + $0x600] sm:$0xff]
    %v247 = vld [vmem:[#allocation4 + $0x608] sm:$0xff]
    %v248 = vld [vmem:[#allocation4 + $0x610] sm:$0xff]
    %v249 = vld [vmem:[#allocation4 + $0x618] sm:$0xff]
    %v250 = vld [vmem:[#allocation4 + $0x620] sm:$0xff]
    %v251 = vld [vmem:[#allocation4 + $0x628] sm:$0xff]
    %v252 = vld [vmem:[#allocation4 + $0x630] sm:$0xff]
    %v253 = vld [vmem:[#allocation4 + $0x638] sm:$0xff]
    %v254 = vld [vmem:[#allocation4 + $0x640] sm:$0xff]
    %v255 = vld [vmem:[#allocation4 + $0x648] sm:$0xff]
    %v256 = vld [vmem:[#allocation4 + $0x650] sm:$0xff]
    %v257 = vld [vmem:[#allocation4 + $0x658] sm:$0xff]
    %v258 = vld [vmem:[#allocation4 + $0x660] sm:$0xff]
    %v259 = vld [vmem:[#allocation4 + $0x668] sm:$0xff]
    %v260 = vld [vmem:[#allocation4 + $0x670] sm:$0xff]
    %v261 = vld [vmem:[#allocation4 + $0x678] sm:$0xff]
    %v262 = vld [vmem:[#allocation4 + $0x680] sm:$0xff]
    %v263 = vld [vmem:[#allocation4 + $0x688] sm:$0xff]
    %v264 = vld [vmem:[#allocation4 + $0x690] sm:$0xff]
    %v265 = vld [vmem:[#allocation4 + $0x698] sm:$0xff]
    %v266 = vld [vmem:[#allocation4 + $0x6a0] sm:$0xff]
    %v267 = vld [vmem:[#allocation4 + $0x6a8] sm:$0xff]
    %v268 = vld [vmem:[#allocation4 + $0x6b0] sm:$0xff]
    %v269 = vld [vmem:[#allocation4 + $0x6b8] sm:$0xff]
    %v270 = vld [vmem:[#allocation4 + $0x6c0] sm:$0xff]
    %v271 = vld [vmem:[#allocation4 + $0x6c8] sm:$0xff]
    %v272 = vld [vmem:[#allocation4 + $0x6d0] sm:$0xff]
    %v273 = vld [vmem:[#allocation4 + $0x6d8] sm:$0xff]
    %v274 = vld [vmem:[#allocation4 + $0x6e0] sm:$0xff]
    %v275 = vld [vmem:[#allocation4 + $0x6e8] sm:$0xff]
    %v276 = vld [vmem:[#allocation4 + $0x6f0] sm:$0xff]
    %v277 = vld [vmem:[#allocation4 + $0x6f8] sm:$0xff]
    %v278 = vld [vmem:[#allocation4 + $0x700] sm:$0xff]
    %v279 = vld [vmem:[#allocation4 + $0x708] sm:$0xff]
    %v280 = vld [vmem:[#allocation4 + $0x710] sm:$0xff]
    %v281 = vld [vmem:[#allocation4 + $0x718] sm:$0xff]
    %v282 = vld [vmem:[#allocation4 + $0x720] sm:$0xff]
    %v283 = vld [vmem:[#allocation4 + $0x728] sm:$0xff]
    %v284 = vld [vmem:[#allocation4 + $0x730] sm:$0xff]
    %v285 = vld [vmem:[#allocation4 + $0x738] sm:$0xff]
    %v286 = vld [vmem:[#allocation4 + $0x740] sm:$0xff]
    %v287 = vld [vmem:[#allocation4 + $0x748] sm:$0xff]
    %v288 = vld [vmem:[#allocation4 + $0x750] sm:$0xff]
    %v289 = vld [vmem:[#allocation4 + $0x758] sm:$0xff]
    %v290 = vld [vmem:[#allocation4 + $0x760] sm:$0xff]
    %v291 = vld [vmem:[#allocation4 + $0x768] sm:$0xff]
    %v292 = vld [vmem:[#allocation4 + $0x770] sm:$0xff]
    %v293 = vld [vmem:[#allocation4 + $0x778] sm:$0xff]
    %v294 = vld [vmem:[#allocation4 + $0x780] sm:$0xff]
    %v295 = vld [vmem:[#allocation4 + $0x788] sm:$0xff]
    %v296 = vld [vmem:[#allocation4 + $0x790] sm:$0xff]
    %v297 = vld [vmem:[#allocation4 + $0x798] sm:$0xff]
    %v298 = vld [vmem:[#allocation4 + $0x7a0] sm:$0xff]
    %v299 = vld [vmem:[#allocation4 + $0x7a8] sm:$0xff]
    %v300 = vld [vmem:[#allocation4 + $0x7b0] sm:$0xff]
    %v301 = vld [vmem:[#allocation4 + $0x7b8] sm:$0xff]
    %v302 = vld [vmem:[#allocation4 + $0x7c0] sm:$0xff]
    %v303 = vld [vmem:[#allocation4 + $0x7c8] sm:$0xff]
    %v304 = vld [vmem:[#allocation4 + $0x7d0] sm:$0xff]
    %v305 = vld [vmem:[#allocation4 + $0x7d8] sm:$0xff]
    %v306 = vld [vmem:[#allocation4 + $0x7e0] sm:$0xff]
    %v307 = vld [vmem:[#allocation4 + $0x7e8] sm:$0xff]
    %v308 = vld [vmem:[#allocation4 + $0x7f0] sm:$0xff]
    %v309 = vld [vmem:[#allocation4 + $0x7f8] sm:$0xff]
    %v314 = vunpack.c.l.b16 %v50
    %v315 = vunpack.c.h.b16 %v50
    %v316 = vunpack.c.l.b16 %v51
    %v317 = vunpack.c.h.b16 %v51
    %v318 = vunpack.c.l.b16 %v52
    %v319 = vunpack.c.h.b16 %v52
    %v320 = vunpack.c.l.b16 %v53
    %v321 = vunpack.c.h.b16 %v53
    %v322 = vpack.c.b16 %v314, %v314
    %v323 = vpack.c.b16 %v315, %v315
    %v324 = vpack.c.b16 %v316, %v316
    %v325 = vpack.c.b16 %v317, %v317
    %v326 = vpack.c.b16 %v318, %v318
    %v327 = vpack.c.b16 %v319, %v319
    %v328 = vpack.c.b16 %v320, %v320
    %v329 = vpack.c.b16 %v321, %v321
    %v594 = vunpack.c.l.b16 %v54
    %v595 = vunpack.c.h.b16 %v54
    %v596 = vunpack.c.l.b16 %v55
    %v597 = vunpack.c.h.b16 %v55
    %v598 = vunpack.c.l.b16 %v56
    %v599 = vunpack.c.h.b16 %v56
    %v600 = vunpack.c.l.b16 %v57
    %v601 = vunpack.c.h.b16 %v57
    %v602 = vunpack.c.l.b16 %v58
    %v603 = vunpack.c.h.b16 %v58
    %v604 = vunpack.c.l.b16 %v59
    %v605 = vunpack.c.h.b16 %v59
    %v606 = vunpack.c.l.b16 %v60
    %v607 = vunpack.c.h.b16 %v60
    %v608 = vunpack.c.l.b16 %v61
    %v609 = vunpack.c.h.b16 %v61
    %v610 = vunpack.c.l.b16 %v62
    %v611 = vunpack.c.h.b16 %v62
    %v612 = vunpack.c.l.b16 %v63
    %v613 = vunpack.c.h.b16 %v63
    %v614 = vunpack.c.l.b16 %v64
    %v615 = vunpack.c.h.b16 %v64
    %v616 = vunpack.c.l.b16 %v65
    %v617 = vunpack.c.h.b16 %v65
    %v618 = vunpack.c.l.b16 %v66
    %v619 = vunpack.c.h.b16 %v66
    %v620 = vunpack.c.l.b16 %v67
    %v621 = vunpack.c.h.b16 %v67
    %v622 = vunpack.c.l.b16 %v68
    %v623 = vunpack.c.h.b16 %v68
    %v624 = vunpack.c.l.b16 %v69
    %v625 = vunpack.c.h.b16 %v69
    %v626 = vunpack.c.l.b16 %v70
    %v627 = vunpack.c.h.b16 %v70
    %v628 = vunpack.c.l.b16 %v71
    %v629 = vunpack.c.h.b16 %v71
    %v630 = vunpack.c.l.b16 %v72
    %v631 = vunpack.c.h.b16 %v72
    %v632 = vunpack.c.l.b16 %v73
    %v633 = vunpack.c.h.b16 %v73
    %v634 = vunpack.c.l.b16 %v74
    %v635 = vunpack.c.h.b16 %v74
    %v636 = vunpack.c.l.b16 %v75
    %v637 = vunpack.c.h.b16 %v75
    %v638 = vunpack.c.l.b16 %v76
    %v639 = vunpack.c.h.b16 %v76
    %v640 = vunpack.c.l.b16 %v77
    %v641 = vunpack.c.h.b16 %v77
    %v642 = vunpack.c.l.b16 %v78
    %v643 = vunpack.c.h.b16 %v78
    %v644 = vunpack.c.l.b16 %v79
    %v645 = vunpack.c.h.b16 %v79
    %v646 = vunpack.c.l.b16 %v80
    %v647 = vunpack.c.h.b16 %v80
    %v648 = vunpack.c.l.b16 %v81
    %v649 = vunpack.c.h.b16 %v81
    %v650 = vunpack.c.l.b16 %v82
    %v651 = vunpack.c.h.b16 %v82
    %v652 = vunpack.c.l.b16 %v83
    %v653 = vunpack.c.h.b16 %v83
    %v654 = vunpack.c.l.b16 %v84
    %v655 = vunpack.c.h.b16 %v84
    %v656 = vunpack.c.l.b16 %v85
    %v657 = vunpack.c.h.b16 %v85
    %v658 = vunpack.c.l.b16 %v86
    %v659 = vunpack.c.h.b16 %v86
    %v660 = vunpack.c.l.b16 %v87
    %v661 = vunpack.c.h.b16 %v87
    %v662 = vunpack.c.l.b16 %v88
    %v663 = vunpack.c.h.b16 %v88
    %v664 = vunpack.c.l.b16 %v89
    %v665 = vunpack.c.h.b16 %v89
    %v666 = vunpack.c.l.b16 %v90
    %v667 = vunpack.c.h.b16 %v90
    %v668 = vunpack.c.l.b16 %v91
    %v669 = vunpack.c.h.b16 %v91
    %v670 = vunpack.c.l.b16 %v92
    %v671 = vunpack.c.h.b16 %v92
    %v672 = vunpack.c.l.b16 %v93
    %v673 = vunpack.c.h.b16 %v93
    %v674 = vunpack.c.l.b16 %v94
    %v675 = vunpack.c.h.b16 %v94
    %v676 = vunpack.c.l.b16 %v95
    %v677 = vunpack.c.h.b16 %v95
    %v678 = vunpack.c.l.b16 %v96
    %v679 = vunpack.c.h.b16 %v96
    %v680 = vunpack.c.l.b16 %v97
    %v681 = vunpack.c.h.b16 %v97
    %v682 = vunpack.c.l.b16 %v98
    %v683 = vunpack.c.h.b16 %v98
    %v684 = vunpack.c.l.b16 %v99
    %v685 = vunpack.c.h.b16 %v99
    %v686 = vunpack.c.l.b16 %v100
    %v687 = vunpack.c.h.b16 %v100
    %v688 = vunpack.c.l.b16 %v101
    %v689 = vunpack.c.h.b16 %v101
    %v690 = vunpack.c.l.b16 %v102
    %v691 = vunpack.c.h.b16 %v102
    %v692 = vunpack.c.l.b16 %v103
    %v693 = vunpack.c.h.b16 %v103
    %v694 = vunpack.c.l.b16 %v104
    %v695 = vunpack.c.h.b16 %v104
    %v696 = vunpack.c.l.b16 %v105
    %v697 = vunpack.c.h.b16 %v105
    %v698 = vunpack.c.l.b16 %v106
    %v699 = vunpack.c.h.b16 %v106
    %v700 = vunpack.c.l.b16 %v107
    %v701 = vunpack.c.h.b16 %v107
    %v702 = vunpack.c.l.b16 %v108
    %v703 = vunpack.c.h.b16 %v108
    %v704 = vunpack.c.l.b16 %v109
    %v705 = vunpack.c.h.b16 %v109
    %v706 = vunpack.c.l.b16 %v110
    %v707 = vunpack.c.h.b16 %v110
    %v708 = vunpack.c.l.b16 %v111
    %v709 = vunpack.c.h.b16 %v111
    %v710 = vunpack.c.l.b16 %v112
    %v711 = vunpack.c.h.b16 %v112
    %v712 = vunpack.c.l.b16 %v113
    %v713 = vunpack.c.h.b16 %v113
    %v714 = vunpack.c.l.b16 %v114
    %v715 = vunpack.c.h.b16 %v114
    %v716 = vunpack.c.l.b16 %v115
    %v717 = vunpack.c.h.b16 %v115
    %v718 = vunpack.c.l.b16 %v116
    %v719 = vunpack.c.h.b16 %v116
    %v720 = vunpack.c.l.b16 %v117
    %v721 = vunpack.c.h.b16 %v117
    %v722 = vunpack.c.l.b16 %v118
    %v723 = vunpack.c.h.b16 %v118
    %v724 = vunpack.c.l.b16 %v119
    %v725 = vunpack.c.h.b16 %v119
    %v726 = vunpack.c.l.b16 %v120
    %v727 = vunpack.c.h.b16 %v120
    %v728 = vunpack.c.l.b16 %v121
    %v729 = vunpack.c.h.b16 %v121
    %v730 = vunpack.c.l.b16 %v122
    %v731 = vunpack.c.h.b16 %v122
    %v732 = vunpack.c.l.b16 %v123
    %v733 = vunpack.c.h.b16 %v123
    %v734 = vunpack.c.l.b16 %v124
    %v735 = vunpack.c.h.b16 %v124
    %v736 = vunpack.c.l.b16 %v125
    %v737 = vunpack.c.h.b16 %v125
    %v738 = vunpack.c.l.b16 %v126
    %v739 = vunpack.c.h.b16 %v126
    %v740 = vunpack.c.l.b16 %v127
    %v741 = vunpack.c.h.b16 %v127
    %v742 = vunpack.c.l.b16 %v128
    %v743 = vunpack.c.h.b16 %v128
    %v744 = vunpack.c.l.b16 %v129
    %v745 = vunpack.c.h.b16 %v129
    %v746 = vunpack.c.l.b16 %v130
    %v747 = vunpack.c.h.b16 %v130
    %v748 = vunpack.c.l.b16 %v131
    %v749 = vunpack.c.h.b16 %v131
    %v750 = vunpack.c.l.b16 %v132
    %v751 = vunpack.c.h.b16 %v132
    %v752 = vunpack.c.l.b16 %v133
    %v753 = vunpack.c.h.b16 %v133
    %v754 = vunpack.c.l.b16 %v134
    %v755 = vunpack.c.h.b16 %v134
    %v756 = vunpack.c.l.b16 %v135
    %v757 = vunpack.c.h.b16 %v135
    %v758 = vunpack.c.l.b16 %v136
    %v759 = vunpack.c.h.b16 %v136
    %v760 = vunpack.c.l.b16 %v137
    %v761 = vunpack.c.h.b16 %v137
    %v762 = vunpack.c.l.b16 %v138
    %v763 = vunpack.c.h.b16 %v138
    %v764 = vunpack.c.l.b16 %v139
    %v765 = vunpack.c.h.b16 %v139
    %v766 = vunpack.c.l.b16 %v140
    %v767 = vunpack.c.h.b16 %v140
    %v768 = vunpack.c.l.b16 %v141
    %v769 = vunpack.c.h.b16 %v141
    %v770 = vunpack.c.l.b16 %v142
    %v771 = vunpack.c.h.b16 %v142
    %v772 = vunpack.c.l.b16 %v143
    %v773 = vunpack.c.h.b16 %v143
    %v774 = vunpack.c.l.b16 %v144
    %v775 = vunpack.c.h.b16 %v144
    %v776 = vunpack.c.l.b16 %v145
    %v777 = vunpack.c.h.b16 %v145
    %v778 = vunpack.c.l.b16 %v146
    %v779 = vunpack.c.h.b16 %v146
    %v780 = vunpack.c.l.b16 %v147
    %v781 = vunpack.c.h.b16 %v147
    %v782 = vunpack.c.l.b16 %v148
    %v783 = vunpack.c.h.b16 %v148
    %v784 = vunpack.c.l.b16 %v149
    %v785 = vunpack.c.h.b16 %v149
    %v786 = vunpack.c.l.b16 %v150
    %v787 = vunpack.c.h.b16 %v150
    %v788 = vunpack.c.l.b16 %v151
    %v789 = vunpack.c.h.b16 %v151
    %v790 = vunpack.c.l.b16 %v152
    %v791 = vunpack.c.h.b16 %v152
    %v792 = vunpack.c.l.b16 %v153
    %v793 = vunpack.c.h.b16 %v153
    %v794 = vunpack.c.l.b16 %v154
    %v795 = vunpack.c.h.b16 %v154
    %v796 = vunpack.c.l.b16 %v155
    %v797 = vunpack.c.h.b16 %v155
    %v798 = vunpack.c.l.b16 %v156
    %v799 = vunpack.c.h.b16 %v156
    %v800 = vunpack.c.l.b16 %v157
    %v801 = vunpack.c.h.b16 %v157
    %v802 = vunpack.c.l.b16 %v158
    %v803 = vunpack.c.h.b16 %v158
    %v804 = vunpack.c.l.b16 %v159
    %v805 = vunpack.c.h.b16 %v159
    %v806 = vunpack.c.l.b16 %v160
    %v807 = vunpack.c.h.b16 %v160
    %v808 = vunpack.c.l.b16 %v161
    %v809 = vunpack.c.h.b16 %v161
    %v810 = vunpack.c.l.b16 %v162
    %v811 = vunpack.c.h.b16 %v162
    %v812 = vunpack.c.l.b16 %v163
    %v813 = vunpack.c.h.b16 %v163
    %v814 = vunpack.c.l.b16 %v164
    %v815 = vunpack.c.h.b16 %v164
    %v816 = vunpack.c.l.b16 %v165
    %v817 = vunpack.c.h.b16 %v165
    %v818 = vunpack.c.l.b16 %v166
    %v819 = vunpack.c.h.b16 %v166
    %v820 = vunpack.c.l.b16 %v167
    %v821 = vunpack.c.h.b16 %v167
    %v822 = vunpack.c.l.b16 %v168
    %v823 = vunpack.c.h.b16 %v168
    %v824 = vunpack.c.l.b16 %v169
    %v825 = vunpack.c.h.b16 %v169
    %v826 = vunpack.c.l.b16 %v170
    %v827 = vunpack.c.h.b16 %v170
    %v828 = vunpack.c.l.b16 %v171
    %v829 = vunpack.c.h.b16 %v171
    %v830 = vunpack.c.l.b16 %v172
    %v831 = vunpack.c.h.b16 %v172
    %v832 = vunpack.c.l.b16 %v173
    %v833 = vunpack.c.h.b16 %v173
    %v834 = vunpack.c.l.b16 %v174
    %v835 = vunpack.c.h.b16 %v174
    %v836 = vunpack.c.l.b16 %v175
    %v837 = vunpack.c.h.b16 %v175
    %v838 = vunpack.c.l.b16 %v176
    %v839 = vunpack.c.h.b16 %v176
    %v840 = vunpack.c.l.b16 %v177
    %v841 = vunpack.c.h.b16 %v177
    %v842 = vunpack.c.l.b16 %v178
    %v843 = vunpack.c.h.b16 %v178
    %v844 = vunpack.c.l.b16 %v179
    %v845 = vunpack.c.h.b16 %v179
    %v846 = vunpack.c.l.b16 %v180
    %v847 = vunpack.c.h.b16 %v180
    %v848 = vunpack.c.l.b16 %v181
    %v849 = vunpack.c.h.b16 %v181
    %v850 = vunpack.c.l.b16 %v182
    %v851 = vunpack.c.h.b16 %v182
    %v852 = vunpack.c.l.b16 %v183
    %v853 = vunpack.c.h.b16 %v183
    %v854 = vunpack.c.l.b16 %v184
    %v855 = vunpack.c.h.b16 %v184
    %v856 = vunpack.c.l.b16 %v185
    %v857 = vunpack.c.h.b16 %v185
    %v858 = vunpack.c.l.b16 %v186
    %v859 = vunpack.c.h.b16 %v186
    %v860 = vunpack.c.l.b16 %v187
    %v861 = vunpack.c.h.b16 %v187
    %v862 = vunpack.c.l.b16 %v188
    %v863 = vunpack.c.h.b16 %v188
    %v864 = vunpack.c.l.b16 %v189
    %v865 = vunpack.c.h.b16 %v189
    %v866 = vunpack.c.l.b16 %v190
    %v867 = vunpack.c.h.b16 %v190
    %v868 = vunpack.c.l.b16 %v191
    %v869 = vunpack.c.h.b16 %v191
    %v870 = vunpack.c.l.b16 %v192
    %v871 = vunpack.c.h.b16 %v192
    %v872 = vunpack.c.l.b16 %v193
    %v873 = vunpack.c.h.b16 %v193
    %v874 = vunpack.c.l.b16 %v194
    %v875 = vunpack.c.h.b16 %v194
    %v876 = vunpack.c.l.b16 %v195
    %v877 = vunpack.c.h.b16 %v195
    %v878 = vunpack.c.l.b16 %v196
    %v879 = vunpack.c.h.b16 %v196
    %v880 = vunpack.c.l.b16 %v197
    %v881 = vunpack.c.h.b16 %v197
    %v882 = vunpack.c.l.b16 %v198
    %v883 = vunpack.c.h.b16 %v198
    %v884 = vunpack.c.l.b16 %v199
    %v885 = vunpack.c.h.b16 %v199
    %v886 = vunpack.c.l.b16 %v200
    %v887 = vunpack.c.h.b16 %v200
    %v888 = vunpack.c.l.b16 %v201
    %v889 = vunpack.c.h.b16 %v201
    %v890 = vunpack.c.l.b16 %v202
    %v891 = vunpack.c.h.b16 %v202
    %v892 = vunpack.c.l.b16 %v203
    %v893 = vunpack.c.h.b16 %v203
    %v894 = vunpack.c.l.b16 %v204
    %v895 = vunpack.c.h.b16 %v204
    %v896 = vunpack.c.l.b16 %v205
    %v897 = vunpack.c.h.b16 %v205
    %v898 = vunpack.c.l.b16 %v206
    %v899 = vunpack.c.h.b16 %v206
    %v900 = vunpack.c.l.b16 %v207
    %v901 = vunpack.c.h.b16 %v207
    %v902 = vunpack.c.l.b16 %v208
    %v903 = vunpack.c.h.b16 %v208
    %v904 = vunpack.c.l.b16 %v209
    %v905 = vunpack.c.h.b16 %v209
    %v906 = vunpack.c.l.b16 %v210
    %v907 = vunpack.c.h.b16 %v210
    %v908 = vunpack.c.l.b16 %v211
    %v909 = vunpack.c.h.b16 %v211
    %v910 = vunpack.c.l.b16 %v212
    %v911 = vunpack.c.h.b16 %v212
    %v912 = vunpack.c.l.b16 %v213
    %v913 = vunpack.c.h.b16 %v213
    %v914 = vunpack.c.l.b16 %v214
    %v915 = vunpack.c.h.b16 %v214
    %v916 = vunpack.c.l.b16 %v215
    %v917 = vunpack.c.h.b16 %v215
    %v918 = vunpack.c.l.b16 %v216
    %v919 = vunpack.c.h.b16 %v216
    %v920 = vunpack.c.l.b16 %v217
    %v921 = vunpack.c.h.b16 %v217
    %v922 = vunpack.c.l.b16 %v218
    %v923 = vunpack.c.h.b16 %v218
    %v924 = vunpack.c.l.b16 %v219
    %v925 = vunpack.c.h.b16 %v219
    %v926 = vunpack.c.l.b16 %v220
    %v927 = vunpack.c.h.b16 %v220
    %v928 = vunpack.c.l.b16 %v221
    %v929 = vunpack.c.h.b16 %v221
    %v930 = vunpack.c.l.b16 %v222
    %v931 = vunpack.c.h.b16 %v222
    %v932 = vunpack.c.l.b16 %v223
    %v933 = vunpack.c.h.b16 %v223
    %v934 = vunpack.c.l.b16 %v224
    %v935 = vunpack.c.h.b16 %v224
    %v936 = vunpack.c.l.b16 %v225
    %v937 = vunpack.c.h.b16 %v225
    %v938 = vunpack.c.l.b16 %v226
    %v939 = vunpack.c.h.b16 %v226
    %v940 = vunpack.c.l.b16 %v227
    %v941 = vunpack.c.h.b16 %v227
    %v942 = vunpack.c.l.b16 %v228
    %v943 = vunpack.c.h.b16 %v228
    %v944 = vunpack.c.l.b16 %v229
    %v945 = vunpack.c.h.b16 %v229
    %v946 = vunpack.c.l.b16 %v230
    %v947 = vunpack.c.h.b16 %v230
    %v948 = vunpack.c.l.b16 %v231
    %v949 = vunpack.c.h.b16 %v231
    %v950 = vunpack.c.l.b16 %v232
    %v951 = vunpack.c.h.b16 %v232
    %v952 = vunpack.c.l.b16 %v233
    %v953 = vunpack.c.h.b16 %v233
    %v954 = vunpack.c.l.b16 %v234
    %v955 = vunpack.c.h.b16 %v234
    %v956 = vunpack.c.l.b16 %v235
    %v957 = vunpack.c.h.b16 %v235
    %v958 = vunpack.c.l.b16 %v236
    %v959 = vunpack.c.h.b16 %v236
    %v960 = vunpack.c.l.b16 %v237
    %v961 = vunpack.c.h.b16 %v237
    %v962 = vunpack.c.l.b16 %v238
    %v963 = vunpack.c.h.b16 %v238
    %v964 = vunpack.c.l.b16 %v239
    %v965 = vunpack.c.h.b16 %v239
    %v966 = vunpack.c.l.b16 %v240
    %v967 = vunpack.c.h.b16 %v240
    %v968 = vunpack.c.l.b16 %v241
    %v969 = vunpack.c.h.b16 %v241
    %v970 = vunpack.c.l.b16 %v242
    %v971 = vunpack.c.h.b16 %v242
    %v972 = vunpack.c.l.b16 %v243
    %v973 = vunpack.c.h.b16 %v243
    %v974 = vunpack.c.l.b16 %v244
    %v975 = vunpack.c.h.b16 %v244
    %v976 = vunpack.c.l.b16 %v245
    %v977 = vunpack.c.h.b16 %v245
    %v978 = vunpack.c.l.b16 %v246
    %v979 = vunpack.c.h.b16 %v246
    %v980 = vunpack.c.l.b16 %v247
    %v981 = vunpack.c.h.b16 %v247
    %v982 = vunpack.c.l.b16 %v248
    %v983 = vunpack.c.h.b16 %v248
    %v984 = vunpack.c.l.b16 %v249
    %v985 = vunpack.c.h.b16 %v249
    %v986 = vunpack.c.l.b16 %v250
    %v987 = vunpack.c.h.b16 %v250
    %v988 = vunpack.c.l.b16 %v251
    %v989 = vunpack.c.h.b16 %v251
    %v990 = vunpack.c.l.b16 %v252
    %v991 = vunpack.c.h.b16 %v252
    %v992 = vunpack.c.l.b16 %v253
    %v993 = vunpack.c.h.b16 %v253
    %v994 = vunpack.c.l.b16 %v254
    %v995 = vunpack.c.h.b16 %v254
    %v996 = vunpack.c.l.b16 %v255
    %v997 = vunpack.c.h.b16 %v255
    %v998 = vunpack.c.l.b16 %v256
    %v999 = vunpack.c.h.b16 %v256
    %v1000 = vunpack.c.l.b16 %v257
    %v1001 = vunpack.c.h.b16 %v257
    %v1002 = vunpack.c.l.b16 %v258
    %v1003 = vunpack.c.h.b16 %v258
    %v1004 = vunpack.c.l.b16 %v259
    %v1005 = vunpack.c.h.b16 %v259
    %v1006 = vunpack.c.l.b16 %v260
    %v1007 = vunpack.c.h.b16 %v260
    %v1008 = vunpack.c.l.b16 %v261
    %v1009 = vunpack.c.h.b16 %v261
    %v1010 = vunpack.c.l.b16 %v262
    %v1011 = vunpack.c.h.b16 %v262
    %v1012 = vunpack.c.l.b16 %v263
    %v1013 = vunpack.c.h.b16 %v263
    %v1014 = vunpack.c.l.b16 %v264
    %v1015 = vunpack.c.h.b16 %v264
    %v1016 = vunpack.c.l.b16 %v265
    %v1017 = vunpack.c.h.b16 %v265
    %v1018 = vunpack.c.l.b16 %v266
    %v1019 = vunpack.c.h.b16 %v266
    %v1020 = vunpack.c.l.b16 %v267
    %v1021 = vunpack.c.h.b16 %v267
    %v1022 = vunpack.c.l.b16 %v268
    %v1023 = vunpack.c.h.b16 %v268
    %v1024 = vunpack.c.l.b16 %v269
    %v1025 = vunpack.c.h.b16 %v269
    %v1026 = vunpack.c.l.b16 %v270
    %v1027 = vunpack.c.h.b16 %v270
    %v1028 = vunpack.c.l.b16 %v271
    %v1029 = vunpack.c.h.b16 %v271
    %v1030 = vunpack.c.l.b16 %v272
    %v1031 = vunpack.c.h.b16 %v272
    %v1032 = vunpack.c.l.b16 %v273
    %v1033 = vunpack.c.h.b16 %v273
    %v1034 = vunpack.c.l.b16 %v274
    %v1035 = vunpack.c.h.b16 %v274
    %v1036 = vunpack.c.l.b16 %v275
    %v1037 = vunpack.c.h.b16 %v275
    %v1038 = vunpack.c.l.b16 %v276
    %v1039 = vunpack.c.h.b16 %v276
    %v1040 = vunpack.c.l.b16 %v277
    %v1041 = vunpack.c.h.b16 %v277
    %v1042 = vunpack.c.l.b16 %v278
    %v1043 = vunpack.c.h.b16 %v278
    %v1044 = vunpack.c.l.b16 %v279
    %v1045 = vunpack.c.h.b16 %v279
    %v1046 = vunpack.c.l.b16 %v280
    %v1047 = vunpack.c.h.b16 %v280
    %v1048 = vunpack.c.l.b16 %v281
    %v1049 = vunpack.c.h.b16 %v281
    %v1050 = vunpack.c.l.b16 %v282
    %v1051 = vunpack.c.h.b16 %v282
    %v1052 = vunpack.c.l.b16 %v283
    %v1053 = vunpack.c.h.b16 %v283
    %v1054 = vunpack.c.l.b16 %v284
    %v1055 = vunpack.c.h.b16 %v284
    %v1056 = vunpack.c.l.b16 %v285
    %v1057 = vunpack.c.h.b16 %v285
    %v1058 = vunpack.c.l.b16 %v286
    %v1059 = vunpack.c.h.b16 %v286
    %v1060 = vunpack.c.l.b16 %v287
    %v1061 = vunpack.c.h.b16 %v287
    %v1062 = vunpack.c.l.b16 %v288
    %v1063 = vunpack.c.h.b16 %v288
    %v1064 = vunpack.c.l.b16 %v289
    %v1065 = vunpack.c.h.b16 %v289
    %v1066 = vunpack.c.l.b16 %v290
    %v1067 = vunpack.c.h.b16 %v290
    %v1068 = vunpack.c.l.b16 %v291
    %v1069 = vunpack.c.h.b16 %v291
    %v1070 = vunpack.c.l.b16 %v292
    %v1071 = vunpack.c.h.b16 %v292
    %v1072 = vunpack.c.l.b16 %v293
    %v1073 = vunpack.c.h.b16 %v293
    %v1074 = vunpack.c.l.b16 %v294
    %v1075 = vunpack.c.h.b16 %v294
    %v1076 = vunpack.c.l.b16 %v295
    %v1077 = vunpack.c.h.b16 %v295
    %v1078 = vunpack.c.l.b16 %v296
    %v1079 = vunpack.c.h.b16 %v296
    %v1080 = vunpack.c.l.b16 %v297
    %v1081 = vunpack.c.h.b16 %v297
    %v1082 = vunpack.c.l.b16 %v298
    %v1083 = vunpack.c.h.b16 %v298
    %v1084 = vunpack.c.l.b16 %v299
    %v1085 = vunpack.c.h.b16 %v299
    %v1086 = vunpack.c.l.b16 %v300
    %v1087 = vunpack.c.h.b16 %v300
    %v1088 = vunpack.c.l.b16 %v301
    %v1089 = vunpack.c.h.b16 %v301
    %v1090 = vunpack.c.l.b16 %v302
    %v1091 = vunpack.c.h.b16 %v302
    %v1092 = vunpack.c.l.b16 %v303
    %v1093 = vunpack.c.h.b16 %v303
    %v1094 = vunpack.c.l.b16 %v304
    %v1095 = vunpack.c.h.b16 %v304
    %v1096 = vunpack.c.l.b16 %v305
    %v1097 = vunpack.c.h.b16 %v305
    %v1098 = vunpack.c.l.b16 %v306
    %v1099 = vunpack.c.h.b16 %v306
    %v1100 = vunpack.c.l.b16 %v307
    %v1101 = vunpack.c.h.b16 %v307
    %v1102 = vunpack.c.l.b16 %v308
    %v1103 = vunpack.c.h.b16 %v308
    %v1104 = vunpack.c.l.b16 %v309
    %v1105 = vunpack.c.h.b16 %v309
    %v1106 = vpack.c.b16 %v598, %v594
    %v1107 = vpack.c.b16 %v599, %v595
    %v1108 = vpack.c.b16 %v600, %v596
    %v1109 = vpack.c.b16 %v601, %v597
    %v1110 = vpack.c.b16 %v606, %v602
    %v1111 = vpack.c.b16 %v607, %v603
    %v1112 = vpack.c.b16 %v608, %v604
    %v1113 = vpack.c.b16 %v609, %v605
    %v1114 = vpack.c.b16 %v614, %v610
    %v1115 = vpack.c.b16 %v615, %v611
    %v1116 = vpack.c.b16 %v616, %v612
    %v1117 = vpack.c.b16 %v617, %v613
    %v1118 = vpack.c.b16 %v622, %v618
    %v1119 = vpack.c.b16 %v623, %v619
    %v1120 = vpack.c.b16 %v624, %v620
    %v1121 = vpack.c.b16 %v625, %v621
    %v1122 = vpack.c.b16 %v630, %v626
    %v1123 = vpack.c.b16 %v631, %v627
    %v1124 = vpack.c.b16 %v632, %v628
    %v1125 = vpack.c.b16 %v633, %v629
    %v1126 = vpack.c.b16 %v638, %v634
    %v1127 = vpack.c.b16 %v639, %v635
    %v1128 = vpack.c.b16 %v640, %v636
    %v1129 = vpack.c.b16 %v641, %v637
    %v1130 = vpack.c.b16 %v646, %v642
    %v1131 = vpack.c.b16 %v647, %v643
    %v1132 = vpack.c.b16 %v648, %v644
    %v1133 = vpack.c.b16 %v649, %v645
    %v1134 = vpack.c.b16 %v654, %v650
    %v1135 = vpack.c.b16 %v655, %v651
    %v1136 = vpack.c.b16 %v656, %v652
    %v1137 = vpack.c.b16 %v657, %v653
    %v1138 = vpack.c.b16 %v662, %v658
    %v1139 = vpack.c.b16 %v663, %v659
    %v1140 = vpack.c.b16 %v664, %v660
    %v1141 = vpack.c.b16 %v665, %v661
    %v1142 = vpack.c.b16 %v670, %v666
    %v1143 = vpack.c.b16 %v671, %v667
    %v1144 = vpack.c.b16 %v672, %v668
    %v1145 = vpack.c.b16 %v673, %v669
    %v1146 = vpack.c.b16 %v678, %v674
    %v1147 = vpack.c.b16 %v679, %v675
    %v1148 = vpack.c.b16 %v680, %v676
    %v1149 = vpack.c.b16 %v681, %v677
    %v1150 = vpack.c.b16 %v686, %v682
    %v1151 = vpack.c.b16 %v687, %v683
    %v1152 = vpack.c.b16 %v688, %v684
    %v1153 = vpack.c.b16 %v689, %v685
    %v1154 = vpack.c.b16 %v694, %v690
    %v1155 = vpack.c.b16 %v695, %v691
    %v1156 = vpack.c.b16 %v696, %v692
    %v1157 = vpack.c.b16 %v697, %v693
    %v1158 = vpack.c.b16 %v702, %v698
    %v1159 = vpack.c.b16 %v703, %v699
    %v1160 = vpack.c.b16 %v704, %v700
    %v1161 = vpack.c.b16 %v705, %v701
    %v1162 = vpack.c.b16 %v710, %v706
    %v1163 = vpack.c.b16 %v711, %v707
    %v1164 = vpack.c.b16 %v712, %v708
    %v1165 = vpack.c.b16 %v713, %v709
    %v1166 = vpack.c.b16 %v718, %v714
    %v1167 = vpack.c.b16 %v719, %v715
    %v1168 = vpack.c.b16 %v720, %v716
    %v1169 = vpack.c.b16 %v721, %v717
    %v1170 = vpack.c.b16 %v726, %v722
    %v1171 = vpack.c.b16 %v727, %v723
    %v1172 = vpack.c.b16 %v728, %v724
    %v1173 = vpack.c.b16 %v729, %v725
    %v1174 = vpack.c.b16 %v734, %v730
    %v1175 = vpack.c.b16 %v735, %v731
    %v1176 = vpack.c.b16 %v736, %v732
    %v1177 = vpack.c.b16 %v737, %v733
    %v1178 = vpack.c.b16 %v742, %v738
    %v1179 = vpack.c.b16 %v743, %v739
    %v1180 = vpack.c.b16 %v744, %v740
    %v1181 = vpack.c.b16 %v745, %v741
    %v1182 = vpack.c.b16 %v750, %v746
    %v1183 = vpack.c.b16 %v751, %v747
    %v1184 = vpack.c.b16 %v752, %v748
    %v1185 = vpack.c.b16 %v753, %v749
    %v1186 = vpack.c.b16 %v758, %v754
    %v1187 = vpack.c.b16 %v759, %v755
    %v1188 = vpack.c.b16 %v760, %v756
    %v1189 = vpack.c.b16 %v761, %v757
    %v1190 = vpack.c.b16 %v766, %v762
    %v1191 = vpack.c.b16 %v767, %v763
    %v1192 = vpack.c.b16 %v768, %v764
    %v1193 = vpack.c.b16 %v769, %v765
    %v1194 = vpack.c.b16 %v774, %v770
    %v1195 = vpack.c.b16 %v775, %v771
    %v1196 = vpack.c.b16 %v776, %v772
    %v1197 = vpack.c.b16 %v777, %v773
    %v1198 = vpack.c.b16 %v782, %v778
    %v1199 = vpack.c.b16 %v783, %v779
    %v1200 = vpack.c.b16 %v784, %v780
    %v1201 = vpack.c.b16 %v785, %v781
    %v1202 = vpack.c.b16 %v790, %v786
    %v1203 = vpack.c.b16 %v791, %v787
    %v1204 = vpack.c.b16 %v792, %v788
    %v1205 = vpack.c.b16 %v793, %v789
    %v1206 = vpack.c.b16 %v798, %v794
    %v1207 = vpack.c.b16 %v799, %v795
    %v1208 = vpack.c.b16 %v800, %v796
    %v1209 = vpack.c.b16 %v801, %v797
    %v1210 = vpack.c.b16 %v806, %v802
    %v1211 = vpack.c.b16 %v807, %v803
    %v1212 = vpack.c.b16 %v808, %v804
    %v1213 = vpack.c.b16 %v809, %v805
    %v1214 = vpack.c.b16 %v814, %v810
    %v1215 = vpack.c.b16 %v815, %v811
    %v1216 = vpack.c.b16 %v816, %v812
    %v1217 = vpack.c.b16 %v817, %v813
    %v1218 = vpack.c.b16 %v822, %v818
    %v1219 = vpack.c.b16 %v823, %v819
    %v1220 = vpack.c.b16 %v824, %v820
    %v1221 = vpack.c.b16 %v825, %v821
    %v1222 = vpack.c.b16 %v830, %v826
    %v1223 = vpack.c.b16 %v831, %v827
    %v1224 = vpack.c.b16 %v832, %v828
    %v1225 = vpack.c.b16 %v833, %v829
    %v1226 = vpack.c.b16 %v838, %v834
    %v1227 = vpack.c.b16 %v839, %v835
    %v1228 = vpack.c.b16 %v840, %v836
    %v1229 = vpack.c.b16 %v841, %v837
    %v1230 = vpack.c.b16 %v846, %v842
    %v1231 = vpack.c.b16 %v847, %v843
    %v1232 = vpack.c.b16 %v848, %v844
    %v1233 = vpack.c.b16 %v849, %v845
    %v1234 = vpack.c.b16 %v854, %v850
    %v1235 = vpack.c.b16 %v855, %v851
    %v1236 = vpack.c.b16 %v856, %v852
    %v1237 = vpack.c.b16 %v857, %v853
    %v1238 = vpack.c.b16 %v862, %v858
    %v1239 = vpack.c.b16 %v863, %v859
    %v1240 = vpack.c.b16 %v864, %v860
    %v1241 = vpack.c.b16 %v865, %v861
    %v1242 = vpack.c.b16 %v870, %v866
    %v1243 = vpack.c.b16 %v871, %v867
    %v1244 = vpack.c.b16 %v872, %v868
    %v1245 = vpack.c.b16 %v873, %v869
    %v1246 = vpack.c.b16 %v878, %v874
    %v1247 = vpack.c.b16 %v879, %v875
    %v1248 = vpack.c.b16 %v880, %v876
    %v1249 = vpack.c.b16 %v881, %v877
    %v1250 = vpack.c.b16 %v886, %v882
    %v1251 = vpack.c.b16 %v887, %v883
    %v1252 = vpack.c.b16 %v888, %v884
    %v1253 = vpack.c.b16 %v889, %v885
    %v1254 = vpack.c.b16 %v894, %v890
    %v1255 = vpack.c.b16 %v895, %v891
    %v1256 = vpack.c.b16 %v896, %v892
    %v1257 = vpack.c.b16 %v897, %v893
    %v1258 = vpack.c.b16 %v902, %v898
    %v1259 = vpack.c.b16 %v903, %v899
    %v1260 = vpack.c.b16 %v904, %v900
    %v1261 = vpack.c.b16 %v905, %v901
    %v1262 = vpack.c.b16 %v910, %v906
    %v1263 = vpack.c.b16 %v911, %v907
    %v1264 = vpack.c.b16 %v912, %v908
    %v1265 = vpack.c.b16 %v913, %v909
    %v1266 = vpack.c.b16 %v918, %v914
    %v1267 = vpack.c.b16 %v919, %v915
    %v1268 = vpack.c.b16 %v920, %v916
    %v1269 = vpack.c.b16 %v921, %v917
    %v1270 = vpack.c.b16 %v926, %v922
    %v1271 = vpack.c.b16 %v927, %v923
    %v1272 = vpack.c.b16 %v928, %v924
    %v1273 = vpack.c.b16 %v929, %v925
    %v1274 = vpack.c.b16 %v934, %v930
    %v1275 = vpack.c.b16 %v935, %v931
    %v1276 = vpack.c.b16 %v936, %v932
    %v1277 = vpack.c.b16 %v937, %v933
    %v1278 = vpack.c.b16 %v942, %v938
    %v1279 = vpack.c.b16 %v943, %v939
    %v1280 = vpack.c.b16 %v944, %v940
    %v1281 = vpack.c.b16 %v945, %v941
    %v1282 = vpack.c.b16 %v950, %v946
    %v1283 = vpack.c.b16 %v951, %v947
    %v1284 = vpack.c.b16 %v952, %v948
    %v1285 = vpack.c.b16 %v953, %v949
    %v1286 = vpack.c.b16 %v958, %v954
    %v1287 = vpack.c.b16 %v959, %v955
    %v1288 = vpack.c.b16 %v960, %v956
    %v1289 = vpack.c.b16 %v961, %v957
    %v1290 = vpack.c.b16 %v966, %v962
    %v1291 = vpack.c.b16 %v967, %v963
    %v1292 = vpack.c.b16 %v968, %v964
    %v1293 = vpack.c.b16 %v969, %v965
    %v1294 = vpack.c.b16 %v974, %v970
    %v1295 = vpack.c.b16 %v975, %v971
    %v1296 = vpack.c.b16 %v976, %v972
    %v1297 = vpack.c.b16 %v977, %v973
    %v1298 = vpack.c.b16 %v982, %v978
    %v1299 = vpack.c.b16 %v983, %v979
    %v1300 = vpack.c.b16 %v984, %v980
    %v1301 = vpack.c.b16 %v985, %v981
    %v1302 = vpack.c.b16 %v990, %v986
    %v1303 = vpack.c.b16 %v991, %v987
    %v1304 = vpack.c.b16 %v992, %v988
    %v1305 = vpack.c.b16 %v993, %v989
    %v1306 = vpack.c.b16 %v998, %v994
    %v1307 = vpack.c.b16 %v999, %v995
    %v1308 = vpack.c.b16 %v1000, %v996
    %v1309 = vpack.c.b16 %v1001, %v997
    %v1310 = vpack.c.b16 %v1006, %v1002
    %v1311 = vpack.c.b16 %v1007, %v1003
    %v1312 = vpack.c.b16 %v1008, %v1004
    %v1313 = vpack.c.b16 %v1009, %v1005
    %v1314 = vpack.c.b16 %v1014, %v1010
    %v1315 = vpack.c.b16 %v1015, %v1011
    %v1316 = vpack.c.b16 %v1016, %v1012
    %v1317 = vpack.c.b16 %v1017, %v1013
    %v1318 = vpack.c.b16 %v1022, %v1018
    %v1319 = vpack.c.b16 %v1023, %v1019
    %v1320 = vpack.c.b16 %v1024, %v1020
    %v1321 = vpack.c.b16 %v1025, %v1021
    %v1322 = vpack.c.b16 %v1030, %v1026
    %v1323 = vpack.c.b16 %v1031, %v1027
    %v1324 = vpack.c.b16 %v1032, %v1028
    %v1325 = vpack.c.b16 %v1033, %v1029
    %v1326 = vpack.c.b16 %v1038, %v1034
    %v1327 = vpack.c.b16 %v1039, %v1035
    %v1328 = vpack.c.b16 %v1040, %v1036
    %v1329 = vpack.c.b16 %v1041, %v1037
    %v1330 = vpack.c.b16 %v1046, %v1042
    %v1331 = vpack.c.b16 %v1047, %v1043
    %v1332 = vpack.c.b16 %v1048, %v1044
    %v1333 = vpack.c.b16 %v1049, %v1045
    %v1334 = vpack.c.b16 %v1054, %v1050
    %v1335 = vpack.c.b16 %v1055, %v1051
    %v1336 = vpack.c.b16 %v1056, %v1052
    %v1337 = vpack.c.b16 %v1057, %v1053
    %v1338 = vpack.c.b16 %v1062, %v1058
    %v1339 = vpack.c.b16 %v1063, %v1059
    %v1340 = vpack.c.b16 %v1064, %v1060
    %v1341 = vpack.c.b16 %v1065, %v1061
    %v1342 = vpack.c.b16 %v1070, %v1066
    %v1343 = vpack.c.b16 %v1071, %v1067
    %v1344 = vpack.c.b16 %v1072, %v1068
    %v1345 = vpack.c.b16 %v1073, %v1069
    %v1346 = vpack.c.b16 %v1078, %v1074
    %v1347 = vpack.c.b16 %v1079, %v1075
    %v1348 = vpack.c.b16 %v1080, %v1076
    %v1349 = vpack.c.b16 %v1081, %v1077
    %v1350 = vpack.c.b16 %v1086, %v1082
    %v1351 = vpack.c.b16 %v1087, %v1083
    %v1352 = vpack.c.b16 %v1088, %v1084
    %v1353 = vpack.c.b16 %v1089, %v1085
    %v1354 = vpack.c.b16 %v1094, %v1090
    %v1355 = vpack.c.b16 %v1095, %v1091
    %v1356 = vpack.c.b16 %v1096, %v1092
    %v1357 = vpack.c.b16 %v1097, %v1093
    %v1358 = vpack.c.b16 %v1102, %v1098
    %v1359 = vpack.c.b16 %v1103, %v1099
    %v1360 = vpack.c.b16 %v1104, %v1100
    %v1361 = vpack.c.b16 %v1105, %v1101
    %1618 = vmatpush.bf16.msra.mxu0 %v1134
    %1619 = vmatpush.bf16.msra.mxu0 %v1130
    %1620 = vmatpush.bf16.msra.mxu0 %v1126
    %1621 = vmatpush.bf16.msra.mxu0 %v1122
    %1622 = vmatpush.bf16.msra.mxu0 %v1118
    %1623 = vmatpush.bf16.msra.mxu0 %v1114
    %1624 = vmatpush.bf16.msra.mxu0 %v1110
    %1625 = vmatpush.bf16.msra.mxu0 %v1106
    %1626 = vmatmul.bf16.gmra.mxu0 %v322
    %v1627 = vpop.f32.mrf.mxu0
    %v1628 = vadd.f32 0.0, %v1627
    %v1629 = vpop.f32.mrf.mxu0
    %1630 = vdwg.mxu0
    %1631 = vmatpush.bf16.msra.mxu0 %v1166
    %1632 = vmatpush.bf16.msra.mxu0 %v1162
    %1633 = vmatpush.bf16.msra.mxu0 %v1158
    %1634 = vmatpush.bf16.msra.mxu0 %v1154
    %1635 = vmatpush.bf16.msra.mxu0 %v1150
    %1636 = vmatpush.bf16.msra.mxu0 %v1146
    %1637 = vmatpush.bf16.msra.mxu0 %v1142
    %1638 = vmatpush.bf16.msra.mxu0 %v1138
    %1639 = vmatmul.bf16.gmra.mxu0 %v323
    %v1640 = vpop.f32.mrf.mxu0
    %v1641 = vadd.f32 %v1628, %v1640
    %v1642 = vpop.f32.mrf.mxu0
    %1643 = vdwg.mxu0
    %1644 = vmatpush.bf16.msra.mxu0 %v1198
    %1645 = vmatpush.bf16.msra.mxu0 %v1194
    %1646 = vmatpush.bf16.msra.mxu0 %v1190
    %1647 = vmatpush.bf16.msra.mxu0 %v1186
    %1648 = vmatpush.bf16.msra.mxu0 %v1182
    %1649 = vmatpush.bf16.msra.mxu0 %v1178
    %1650 = vmatpush.bf16.msra.mxu0 %v1174
    %1651 = vmatpush.bf16.msra.mxu0 %v1170
    %1652 = vmatmul.bf16.gmra.mxu0 %v324
    %v1653 = vpop.f32.mrf.mxu0
    %v1654 = vadd.f32 %v1641, %v1653
    %v1655 = vpop.f32.mrf.mxu0
    %1656 = vdwg.mxu0
    %1657 = vmatpush.bf16.msra.mxu0 %v1230
    %1658 = vmatpush.bf16.msra.mxu0 %v1226
    %1659 = vmatpush.bf16.msra.mxu0 %v1222
    %1660 = vmatpush.bf16.msra.mxu0 %v1218
    %1661 = vmatpush.bf16.msra.mxu0 %v1214
    %1662 = vmatpush.bf16.msra.mxu0 %v1210
    %1663 = vmatpush.bf16.msra.mxu0 %v1206
    %1664 = vmatpush.bf16.msra.mxu0 %v1202
    %1665 = vmatmul.bf16.gmra.mxu0 %v325
    %v1666 = vpop.f32.mrf.mxu0
    %v1667 = vadd.f32 %v1654, %v1666
    %v1668 = vpop.f32.mrf.mxu0
    %1669 = vdwg.mxu0
    %1670 = vmatpush.bf16.msra.mxu0 %v1262
    %1671 = vmatpush.bf16.msra.mxu0 %v1258
    %1672 = vmatpush.bf16.msra.mxu0 %v1254
    %1673 = vmatpush.bf16.msra.mxu0 %v1250
    %1674 = vmatpush.bf16.msra.mxu0 %v1246
    %1675 = vmatpush.bf16.msra.mxu0 %v1242
    %1676 = vmatpush.bf16.msra.mxu0 %v1238
    %1677 = vmatpush.bf16.msra.mxu0 %v1234
    %1678 = vmatmul.bf16.gmra.mxu0 %v326
    %v1679 = vpop.f32.mrf.mxu0
    %v1680 = vadd.f32 %v1667, %v1679
    %v1681 = vpop.f32.mrf.mxu0
    %1682 = vdwg.mxu0
    %1683 = vmatpush.bf16.msra.mxu0 %v1294
    %1684 = vmatpush.bf16.msra.mxu0 %v1290
    %1685 = vmatpush.bf16.msra.mxu0 %v1286
    %1686 = vmatpush.bf16.msra.mxu0 %v1282
    %1687 = vmatpush.bf16.msra.mxu0 %v1278
    %1688 = vmatpush.bf16.msra.mxu0 %v1274
    %1689 = vmatpush.bf16.msra.mxu0 %v1270
    %1690 = vmatpush.bf16.msra.mxu0 %v1266
    %1691 = vmatmul.bf16.gmra.mxu0 %v327
    %v1692 = vpop.f32.mrf.mxu0
    %v1693 = vadd.f32 %v1680, %v1692
    %v1694 = vpop.f32.mrf.mxu0
    %1695 = vdwg.mxu0
    %1696 = vmatpush.bf16.msra.mxu0 %v1326
    %1697 = vmatpush.bf16.msra.mxu0 %v1322
    %1698 = vmatpush.bf16.msra.mxu0 %v1318
    %1699 = vmatpush.bf16.msra.mxu0 %v1314
    %1700 = vmatpush.bf16.msra.mxu0 %v1310
    %1701 = vmatpush.bf16.msra.mxu0 %v1306
    %1702 = vmatpush.bf16.msra.mxu0 %v1302
    %1703 = vmatpush.bf16.msra.mxu0 %v1298
    %1704 = vmatmul.bf16.gmra.mxu0 %v328
    %v1705 = vpop.f32.mrf.mxu0
    %v1706 = vadd.f32 %v1693, %v1705
    %v1707 = vpop.f32.mrf.mxu0
    %1708 = vdwg.mxu0
    %1709 = vmatpush.bf16.msra.mxu0 %v1358
    %1710 = vmatpush.bf16.msra.mxu0 %v1354
    %1711 = vmatpush.bf16.msra.mxu0 %v1350
    %1712 = vmatpush.bf16.msra.mxu0 %v1346
    %1713 = vmatpush.bf16.msra.mxu0 %v1342
    %1714 = vmatpush.bf16.msra.mxu0 %v1338
    %1715 = vmatpush.bf16.msra.mxu0 %v1334
    %1716 = vmatpush.bf16.msra.mxu0 %v1330
    %1717 = vmatmul.bf16.gmra.mxu0 %v329
    %v1718 = vpop.f32.mrf.mxu0
    %v1719 = vadd.f32 %v1706, %v1718
    %v1720 = vpop.f32.mrf.mxu0
    %1721 = vdwg.mxu0
    %1722 = vmatpush.bf16.msra.mxu0 %v1135
    %1723 = vmatpush.bf16.msra.mxu0 %v1131
    %1724 = vmatpush.bf16.msra.mxu0 %v1127
    %1725 = vmatpush.bf16.msra.mxu0 %v1123
    %1726 = vmatpush.bf16.msra.mxu0 %v1119
    %1727 = vmatpush.bf16.msra.mxu0 %v1115
    %1728 = vmatpush.bf16.msra.mxu0 %v1111
    %1729 = vmatpush.bf16.msra.mxu0 %v1107
    %1730 = vmatmul.bf16.gmra.mxu0 %v322
    %v1731 = vpop.f32.mrf.mxu0
    %v1732 = vadd.f32 0.0, %v1731
    %v1733 = vpop.f32.mrf.mxu0
    %1734 = vdwg.mxu0
    %1735 = vmatpush.bf16.msra.mxu0 %v1167
    %1736 = vmatpush.bf16.msra.mxu0 %v1163
    %1737 = vmatpush.bf16.msra.mxu0 %v1159
    %1738 = vmatpush.bf16.msra.mxu0 %v1155
    %1739 = vmatpush.bf16.msra.mxu0 %v1151
    %1740 = vmatpush.bf16.msra.mxu0 %v1147
    %1741 = vmatpush.bf16.msra.mxu0 %v1143
    %1742 = vmatpush.bf16.msra.mxu0 %v1139
    %1743 = vmatmul.bf16.gmra.mxu0 %v323
    %v1744 = vpop.f32.mrf.mxu0
    %v1745 = vadd.f32 %v1732, %v1744
    %v1746 = vpop.f32.mrf.mxu0
    %1747 = vdwg.mxu0
    %1748 = vmatpush.bf16.msra.mxu0 %v1199
    %1749 = vmatpush.bf16.msra.mxu0 %v1195
    %1750 = vmatpush.bf16.msra.mxu0 %v1191
    %1751 = vmatpush.bf16.msra.mxu0 %v1187
    %1752 = vmatpush.bf16.msra.mxu0 %v1183
    %1753 = vmatpush.bf16.msra.mxu0 %v1179
    %1754 = vmatpush.bf16.msra.mxu0 %v1175
    %1755 = vmatpush.bf16.msra.mxu0 %v1171
    %1756 = vmatmul.bf16.gmra.mxu0 %v324
    %v1757 = vpop.f32.mrf.mxu0
    %v1758 = vadd.f32 %v1745, %v1757
    %v1759 = vpop.f32.mrf.mxu0
    %1760 = vdwg.mxu0
    %1761 = vmatpush.bf16.msra.mxu0 %v1231
    %1762 = vmatpush.bf16.msra.mxu0 %v1227
    %1763 = vmatpush.bf16.msra.mxu0 %v1223
    %1764 = vmatpush.bf16.msra.mxu0 %v1219
    %1765 = vmatpush.bf16.msra.mxu0 %v1215
    %1766 = vmatpush.bf16.msra.mxu0 %v1211
    %1767 = vmatpush.bf16.msra.mxu0 %v1207
    %1768 = vmatpush.bf16.msra.mxu0 %v1203
    %1769 = vmatmul.bf16.gmra.mxu0 %v325
    %v1770 = vpop.f32.mrf.mxu0
    %v1771 = vadd.f32 %v1758, %v1770
    %v1772 = vpop.f32.mrf.mxu0
    %1773 = vdwg.mxu0
    %1774 = vmatpush.bf16.msra.mxu0 %v1263
    %1775 = vmatpush.bf16.msra.mxu0 %v1259
    %1776 = vmatpush.bf16.msra.mxu0 %v1255
    %1777 = vmatpush.bf16.msra.mxu0 %v1251
    %1778 = vmatpush.bf16.msra.mxu0 %v1247
    %1779 = vmatpush.bf16.msra.mxu0 %v1243
    %1780 = vmatpush.bf16.msra.mxu0 %v1239
    %1781 = vmatpush.bf16.msra.mxu0 %v1235
    %1782 = vmatmul.bf16.gmra.mxu0 %v326
    %v1783 = vpop.f32.mrf.mxu0
    %v1784 = vadd.f32 %v1771, %v1783
    %v1785 = vpop.f32.mrf.mxu0
    %1786 = vdwg.mxu0
    %1787 = vmatpush.bf16.msra.mxu0 %v1295
    %1788 = vmatpush.bf16.msra.mxu0 %v1291
    %1789 = vmatpush.bf16.msra.mxu0 %v1287
    %1790 = vmatpush.bf16.msra.mxu0 %v1283
    %1791 = vmatpush.bf16.msra.mxu0 %v1279
    %1792 = vmatpush.bf16.msra.mxu0 %v1275
    %1793 = vmatpush.bf16.msra.mxu0 %v1271
    %1794 = vmatpush.bf16.msra.mxu0 %v1267
    %1795 = vmatmul.bf16.gmra.mxu0 %v327
    %v1796 = vpop.f32.mrf.mxu0
    %v1797 = vadd.f32 %v1784, %v1796
    %v1798 = vpop.f32.mrf.mxu0
    %1799 = vdwg.mxu0
    %1800 = vmatpush.bf16.msra.mxu0 %v1327
    %1801 = vmatpush.bf16.msra.mxu0 %v1323
    %1802 = vmatpush.bf16.msra.mxu0 %v1319
    %1803 = vmatpush.bf16.msra.mxu0 %v1315
    %1804 = vmatpush.bf16.msra.mxu0 %v1311
    %1805 = vmatpush.bf16.msra.mxu0 %v1307
    %1806 = vmatpush.bf16.msra.mxu0 %v1303
    %1807 = vmatpush.bf16.msra.mxu0 %v1299
    %1808 = vmatmul.bf16.gmra.mxu0 %v328
    %v1809 = vpop.f32.mrf.mxu0
    %v1810 = vadd.f32 %v1797, %v1809
    %v1811 = vpop.f32.mrf.mxu0
    %1812 = vdwg.mxu0
    %1813 = vmatpush.bf16.msra.mxu0 %v1359
    %1814 = vmatpush.bf16.msra.mxu0 %v1355
    %1815 = vmatpush.bf16.msra.mxu0 %v1351
    %1816 = vmatpush.bf16.msra.mxu0 %v1347
    %1817 = vmatpush.bf16.msra.mxu0 %v1343
    %1818 = vmatpush.bf16.msra.mxu0 %v1339
    %1819 = vmatpush.bf16.msra.mxu0 %v1335
    %1820 = vmatpush.bf16.msra.mxu0 %v1331
    %1821 = vmatmul.bf16.gmra.mxu0 %v329
    %v1822 = vpop.f32.mrf.mxu0
    %v1823 = vadd.f32 %v1810, %v1822
    %v1824 = vpop.f32.mrf.mxu0
    %1825 = vdwg.mxu0
    %1826 = vmatpush.bf16.msra.mxu0 %v1136
    %1827 = vmatpush.bf16.msra.mxu0 %v1132
    %1828 = vmatpush.bf16.msra.mxu0 %v1128
    %1829 = vmatpush.bf16.msra.mxu0 %v1124
    %1830 = vmatpush.bf16.msra.mxu0 %v1120
    %1831 = vmatpush.bf16.msra.mxu0 %v1116
    %1832 = vmatpush.bf16.msra.mxu0 %v1112
    %1833 = vmatpush.bf16.msra.mxu0 %v1108
    %1834 = vmatmul.bf16.gmra.mxu0 %v322
    %v1835 = vpop.f32.mrf.mxu0
    %v1836 = vadd.f32 0.0, %v1835
    %v1837 = vpop.f32.mrf.mxu0
    %1838 = vdwg.mxu0
    %1839 = vmatpush.bf16.msra.mxu0 %v1168
    %1840 = vmatpush.bf16.msra.mxu0 %v1164
    %1841 = vmatpush.bf16.msra.mxu0 %v1160
    %1842 = vmatpush.bf16.msra.mxu0 %v1156
    %1843 = vmatpush.bf16.msra.mxu0 %v1152
    %1844 = vmatpush.bf16.msra.mxu0 %v1148
    %1845 = vmatpush.bf16.msra.mxu0 %v1144
    %1846 = vmatpush.bf16.msra.mxu0 %v1140
    %1847 = vmatmul.bf16.gmra.mxu0 %v323
    %v1848 = vpop.f32.mrf.mxu0
    %v1849 = vadd.f32 %v1836, %v1848
    %v1850 = vpop.f32.mrf.mxu0
    %1851 = vdwg.mxu0
    %1852 = vmatpush.bf16.msra.mxu0 %v1200
    %1853 = vmatpush.bf16.msra.mxu0 %v1196
    %1854 = vmatpush.bf16.msra.mxu0 %v1192
    %1855 = vmatpush.bf16.msra.mxu0 %v1188
    %1856 = vmatpush.bf16.msra.mxu0 %v1184
    %1857 = vmatpush.bf16.msra.mxu0 %v1180
    %1858 = vmatpush.bf16.msra.mxu0 %v1176
    %1859 = vmatpush.bf16.msra.mxu0 %v1172
    %1860 = vmatmul.bf16.gmra.mxu0 %v324
    %v1861 = vpop.f32.mrf.mxu0
    %v1862 = vadd.f32 %v1849, %v1861
    %v1863 = vpop.f32.mrf.mxu0
    %1864 = vdwg.mxu0
    %1865 = vmatpush.bf16.msra.mxu0 %v1232
    %1866 = vmatpush.bf16.msra.mxu0 %v1228
    %1867 = vmatpush.bf16.msra.mxu0 %v1224
    %1868 = vmatpush.bf16.msra.mxu0 %v1220
    %1869 = vmatpush.bf16.msra.mxu0 %v1216
    %1870 = vmatpush.bf16.msra.mxu0 %v1212
    %1871 = vmatpush.bf16.msra.mxu0 %v1208
    %1872 = vmatpush.bf16.msra.mxu0 %v1204
    %1873 = vmatmul.bf16.gmra.mxu0 %v325
    %v1874 = vpop.f32.mrf.mxu0
    %v1875 = vadd.f32 %v1862, %v1874
    %v1876 = vpop.f32.mrf.mxu0
    %1877 = vdwg.mxu0
    %1878 = vmatpush.bf16.msra.mxu0 %v1264
    %1879 = vmatpush.bf16.msra.mxu0 %v1260
    %1880 = vmatpush.bf16.msra.mxu0 %v1256
    %1881 = vmatpush.bf16.msra.mxu0 %v1252
    %1882 = vmatpush.bf16.msra.mxu0 %v1248
    %1883 = vmatpush.bf16.msra.mxu0 %v1244
    %1884 = vmatpush.bf16.msra.mxu0 %v1240
    %1885 = vmatpush.bf16.msra.mxu0 %v1236
    %1886 = vmatmul.bf16.gmra.mxu0 %v326
    %v1887 = vpop.f32.mrf.mxu0
    %v1888 = vadd.f32 %v1875, %v1887
    %v1889 = vpop.f32.mrf.mxu0
    %1890 = vdwg.mxu0
    %1891 = vmatpush.bf16.msra.mxu0 %v1296
    %1892 = vmatpush.bf16.msra.mxu0 %v1292
    %1893 = vmatpush.bf16.msra.mxu0 %v1288
    %1894 = vmatpush.bf16.msra.mxu0 %v1284
    %1895 = vmatpush.bf16.msra.mxu0 %v1280
    %1896 = vmatpush.bf16.msra.mxu0 %v1276
    %1897 = vmatpush.bf16.msra.mxu0 %v1272
    %1898 = vmatpush.bf16.msra.mxu0 %v1268
    %1899 = vmatmul.bf16.gmra.mxu0 %v327
    %v1900 = vpop.f32.mrf.mxu0
    %v1901 = vadd.f32 %v1888, %v1900
    %v1902 = vpop.f32.mrf.mxu0
    %1903 = vdwg.mxu0
    %1904 = vmatpush.bf16.msra.mxu0 %v1328
    %1905 = vmatpush.bf16.msra.mxu0 %v1324
    %1906 = vmatpush.bf16.msra.mxu0 %v1320
    %1907 = vmatpush.bf16.msra.mxu0 %v1316
    %1908 = vmatpush.bf16.msra.mxu0 %v1312
    %1909 = vmatpush.bf16.msra.mxu0 %v1308
    %1910 = vmatpush.bf16.msra.mxu0 %v1304
    %1911 = vmatpush.bf16.msra.mxu0 %v1300
    %1912 = vmatmul.bf16.gmra.mxu0 %v328
    %v1913 = vpop.f32.mrf.mxu0
    %v1914 = vadd.f32 %v1901, %v1913
    %v1915 = vpop.f32.mrf.mxu0
    %1916 = vdwg.mxu0
    %1917 = vmatpush.bf16.msra.mxu0 %v1360
    %1918 = vmatpush.bf16.msra.mxu0 %v1356
    %1919 = vmatpush.bf16.msra.mxu0 %v1352
    %1920 = vmatpush.bf16.msra.mxu0 %v1348
    %1921 = vmatpush.bf16.msra.mxu0 %v1344
    %1922 = vmatpush.bf16.msra.mxu0 %v1340
    %1923 = vmatpush.bf16.msra.mxu0 %v1336
    %1924 = vmatpush.bf16.msra.mxu0 %v1332
    %1925 = vmatmul.bf16.gmra.mxu0 %v329
    %v1926 = vpop.f32.mrf.mxu0
    %v1927 = vadd.f32 %v1914, %v1926
    %v1928 = vpop.f32.mrf.mxu0
    %1929 = vdwg.mxu0
    %1930 = vmatpush.bf16.msra.mxu0 %v1137
    %1931 = vmatpush.bf16.msra.mxu0 %v1133
    %1932 = vmatpush.bf16.msra.mxu0 %v1129
    %1933 = vmatpush.bf16.msra.mxu0 %v1125
    %1934 = vmatpush.bf16.msra.mxu0 %v1121
    %1935 = vmatpush.bf16.msra.mxu0 %v1117
    %1936 = vmatpush.bf16.msra.mxu0 %v1113
    %1937 = vmatpush.bf16.msra.mxu0 %v1109
    %1938 = vmatmul.bf16.gmra.mxu0 %v322
    %v1939 = vpop.f32.mrf.mxu0
    %v1940 = vadd.f32 0.0, %v1939
    %v1941 = vpop.f32.mrf.mxu0
    %1942 = vdwg.mxu0
    %1943 = vmatpush.bf16.msra.mxu0 %v1169
    %1944 = vmatpush.bf16.msra.mxu0 %v1165
    %1945 = vmatpush.bf16.msra.mxu0 %v1161
    %1946 = vmatpush.bf16.msra.mxu0 %v1157
    %1947 = vmatpush.bf16.msra.mxu0 %v1153
    %1948 = vmatpush.bf16.msra.mxu0 %v1149
    %1949 = vmatpush.bf16.msra.mxu0 %v1145
    %1950 = vmatpush.bf16.msra.mxu0 %v1141
    %1951 = vmatmul.bf16.gmra.mxu0 %v323
    %v1952 = vpop.f32.mrf.mxu0
    %v1953 = vadd.f32 %v1940, %v1952
    %v1954 = vpop.f32.mrf.mxu0
    %1955 = vdwg.mxu0
    %1956 = vmatpush.bf16.msra.mxu0 %v1201
    %1957 = vmatpush.bf16.msra.mxu0 %v1197
    %1958 = vmatpush.bf16.msra.mxu0 %v1193
    %1959 = vmatpush.bf16.msra.mxu0 %v1189
    %1960 = vmatpush.bf16.msra.mxu0 %v1185
    %1961 = vmatpush.bf16.msra.mxu0 %v1181
    %1962 = vmatpush.bf16.msra.mxu0 %v1177
    %1963 = vmatpush.bf16.msra.mxu0 %v1173
    %1964 = vmatmul.bf16.gmra.mxu0 %v324
    %v1965 = vpop.f32.mrf.mxu0
    %v1966 = vadd.f32 %v1953, %v1965
    %v1967 = vpop.f32.mrf.mxu0
    %1968 = vdwg.mxu0
    %1969 = vmatpush.bf16.msra.mxu0 %v1233
    %1970 = vmatpush.bf16.msra.mxu0 %v1229
    %1971 = vmatpush.bf16.msra.mxu0 %v1225
    %1972 = vmatpush.bf16.msra.mxu0 %v1221
    %1973 = vmatpush.bf16.msra.mxu0 %v1217
    %1974 = vmatpush.bf16.msra.mxu0 %v1213
    %1975 = vmatpush.bf16.msra.mxu0 %v1209
    %1976 = vmatpush.bf16.msra.mxu0 %v1205
    %1977 = vmatmul.bf16.gmra.mxu0 %v325
    %v1978 = vpop.f32.mrf.mxu0
    %v1979 = vadd.f32 %v1966, %v1978
    %v1980 = vpop.f32.mrf.mxu0
    %1981 = vdwg.mxu0
    %1982 = vmatpush.bf16.msra.mxu0 %v1265
    %1983 = vmatpush.bf16.msra.mxu0 %v1261
    %1984 = vmatpush.bf16.msra.mxu0 %v1257
    %1985 = vmatpush.bf16.msra.mxu0 %v1253
    %1986 = vmatpush.bf16.msra.mxu0 %v1249
    %1987 = vmatpush.bf16.msra.mxu0 %v1245
    %1988 = vmatpush.bf16.msra.mxu0 %v1241
    %1989 = vmatpush.bf16.msra.mxu0 %v1237
    %1990 = vmatmul.bf16.gmra.mxu0 %v326
    %v1991 = vpop.f32.mrf.mxu0
    %v1992 = vadd.f32 %v1979, %v1991
    %v1993 = vpop.f32.mrf.mxu0
    %1994 = vdwg.mxu0
    %1995 = vmatpush.bf16.msra.mxu0 %v1297
    %1996 = vmatpush.bf16.msra.mxu0 %v1293
    %1997 = vmatpush.bf16.msra.mxu0 %v1289
    %1998 = vmatpush.bf16.msra.mxu0 %v1285
    %1999 = vmatpush.bf16.msra.mxu0 %v1281
    %2000 = vmatpush.bf16.msra.mxu0 %v1277
    %2001 = vmatpush.bf16.msra.mxu0 %v1273
    %2002 = vmatpush.bf16.msra.mxu0 %v1269
    %2003 = vmatmul.bf16.gmra.mxu0 %v327
    %v2004 = vpop.f32.mrf.mxu0
    %v2005 = vadd.f32 %v1992, %v2004
    %v2006 = vpop.f32.mrf.mxu0
    %2007 = vdwg.mxu0
    %2008 = vmatpush.bf16.msra.mxu0 %v1329
    %2009 = vmatpush.bf16.msra.mxu0 %v1325
    %2010 = vmatpush.bf16.msra.mxu0 %v1321
    %2011 = vmatpush.bf16.msra.mxu0 %v1317
    %2012 = vmatpush.bf16.msra.mxu0 %v1313
    %2013 = vmatpush.bf16.msra.mxu0 %v1309
    %2014 = vmatpush.bf16.msra.mxu0 %v1305
    %2015 = vmatpush.bf16.msra.mxu0 %v1301
    %2016 = vmatmul.bf16.gmra.mxu0 %v328
    %v2017 = vpop.f32.mrf.mxu0
    %v2018 = vadd.f32 %v2005, %v2017
    %v2019 = vpop.f32.mrf.mxu0
    %2020 = vdwg.mxu0
    %2021 = vmatpush.bf16.msra.mxu0 %v1361
    %2022 = vmatpush.bf16.msra.mxu0 %v1357
    %2023 = vmatpush.bf16.msra.mxu0 %v1353
    %2024 = vmatpush.bf16.msra.mxu0 %v1349
    %2025 = vmatpush.bf16.msra.mxu0 %v1345
    %2026 = vmatpush.bf16.msra.mxu0 %v1341
    %2027 = vmatpush.bf16.msra.mxu0 %v1337
    %2028 = vmatpush.bf16.msra.mxu0 %v1333
    %2029 = vmatmul.bf16.gmra.mxu0 %v329
    %v2030 = vpop.f32.mrf.mxu0
    %v2031 = vadd.f32 %v2018, %v2030
    %v2032 = vpop.f32.mrf.mxu0
    %2033 = vdwg.mxu0
    %v2034 = vadd.f32 %v46, %v1719
    %v2035 = vadd.f32 %v47, %v1823
    %v2036 = vadd.f32 %v48, %v1927
    %v2037 = vadd.f32 %v49, %v2031
    %2038 = vst [vmem:[#allocation2] sm:$0xff] %v2034
    %2039 = vst [vmem:[#allocation2 + $0x8] sm:$0xff] %v2035
    %2040 = vst [vmem:[#allocation2 + $0x10] sm:$0xff] %v2036
    %2041 = vst [vmem:[#allocation2 + $0x18] sm:$0xff] %v2037
    // Predicated region
    $region30: #{forward.1} parent=1 // pred_check
      %p2042 = pneg %p38
    $region31: #{forward.1} parent=1 // pred_check_branch
      %2044 = sbr.rel (%p2042) target = $region33
    $region32: #{forward.1} parent=1 // pred_region
      %v2045 = vld [vmem:[#allocation2] sm:$0xff]
      %v2046 = vld [vmem:[#allocation2 + $0x8] sm:$0xff]
      %v2047 = vld [vmem:[#allocation2 + $0x10] sm:$0xff]
      %v2048 = vld [vmem:[#allocation2 + $0x18] sm:$0xff]
      %v2049 = vld [vmem:[%s2] sm:$0xf]
      %v2051 = vperm.slane %v2049, 0
      %v2052 = vperm.slane %v2049, 1
      %v2053 = vperm.slane %v2049, 2
      %v2054 = vperm.slane %v2049, 3
      %v2059 = vadd.f32 %v2045, %v2051
      %v2060 = vadd.f32 %v2046, %v2052
      %v2061 = vadd.f32 %v2047, %v2053
      %v2062 = vadd.f32 %v2048, %v2054
      %v2063 = vmax.f32 %v2059, 0.0
      %v2064 = vmax.f32 %v2060, 0.0
      %v2065 = vmax.f32 %v2061, 0.0
      %v2066 = vmax.f32 %v2062, 0.0
      %v2067 = vld [vmem:[%s3] sm:$0xf]
      %v2069 = vperm.slane %v2067, 0
      %v2070 = vperm.slane %v2067, 1
      %v2071 = vperm.slane %v2067, 2
      %v2072 = vperm.slane %v2067, 3
      %v2077 = vmul.f32 %v2063, %v2069
      %v2078 = vmul.f32 %v2064, %v2070
      %v2079 = vmul.f32 %v2065, %v2071
      %v2080 = vmul.f32 %v2066, %v2072
      %v2081 = vadd.f32 %v2077, %v2078
      %v2082 = vadd.f32 %v2081, %v2079
      %v2083 = vadd.f32 %v2082, %v2080
      %2084 = vadd.xlane.f32.xlu0 %v2083
      %v2085 = vpop.xlane.xlu0 %2084
      %v2086 = vld [vmem:[#allocation3] sm:$0x1]
      %v2088 = vperm.slane %v2086, 0
      %v2090 = vadd.f32 %v2085, %v2088
      %vm2091 = vcmask 7168
      %2092 = vst.msk [vmem:[%s5] sm:$0xff] %vm2091, %v2090
    $region33: #{forward.1} parent=1 // pred_fallthru
      _
    // Predicated region
    $region34: #{forward.1} parent=1 // pred_check
      _
    $region35: #{forward.1} parent=1 // pred_check_branch
      %2094 = sbr.rel (0) target = $region37
    $region36: #{forward.1} parent=1 // pred_region
      _
    $region37: #{forward.1} parent=1 // pred_fallthru
      _
    // Predicated region
    $region38: #{forward.1} parent=1 // pred_check
      _
    $region39: #{forward.1} parent=1 // pred_check_branch
      %2096 = sbr.rel (0) target = $region41
    $region40: #{forward.1} parent=1 // pred_region
      _
    $region41: #{forward.1} parent=1 // pred_fallthru
      _
    %2097 = vsyncpa [#allocation5], 1

</llo_original>
